<compile_context>
chip_gen: v7x
topology: tpu7x:2x2x1
jax: 0.10.0
libtpu: 0.0.40
codegen_flags: <defaults>
</compile_context>

<pallas_src>
import jax
import jax.numpy as jnp
from jax.experimental import pallas as pl
from jax.experimental.pallas import tpu as pltpu


# Scoped-VMEM budget: keep <= ~48 MiB for v7x (64 MiB physical per TC);
# can be raised to ~96 MiB on v5e/v6e (128 MiB physical).
VMEM_LIMIT = 48 * 1024 * 1024


# ---------------------------------------------------------------------------
# Linear layers (nn.Linear) -- row-tiled bf16 MXU matmuls
# ---------------------------------------------------------------------------

def _qkv_kernel(x_ref, wq_ref, wk_ref, wv_ref, bq_ref, bk_ref, bv_ref,
                q_ref, k_ref, v_ref):
    # x: (tn, Cin) f32 -> bf16; w*: (C, Cin) bf16 resident; b*: (1, C) f32.
    xb = x_ref[...].astype(jnp.bfloat16)

    def _one(w_ref, b_ref, o_ref):
        y = jax.lax.dot_general(xb, w_ref[...],
                                dimension_numbers=(((1,), (1,)), ((), ())),
                                preferred_element_type=jnp.float32)
        o_ref[...] = (y + b_ref[...]).astype(o_ref.dtype)

    _one(wq_ref, bq_ref, q_ref)
    _one(wk_ref, bk_ref, k_ref)
    _one(wv_ref, bv_ref, v_ref)


def qkv_linear_pallas(x2d, wq, wk, wv, bq, bk, bv, row_tile=1024):
    """Emits (q, k, v), each (N, C) bf16.  q is pre-scaled via folded weights."""
    N, Cin = x2d.shape
    C = wq.shape[0]
    tn = N if N <= row_tile else max(8, (row_tile // 8) * 8)
    w_spec = pl.BlockSpec((C, Cin), lambda i: (0, 0))      # resident weight
    b_spec = pl.BlockSpec((1, C), lambda i: (0, 0))        # resident bias
    o_sds = jax.ShapeDtypeStruct((N, C), jnp.bfloat16)
    o_spec = pl.BlockSpec((tn, C), lambda i: (i, 0))
    return pl.pallas_call(
        _qkv_kernel,
        out_shape=(o_sds, o_sds, o_sds),
        grid=(pl.cdiv(N, tn),),
        in_specs=[pl.BlockSpec((tn, Cin), lambda i: (i, 0)),
                  w_spec, w_spec, w_spec, b_spec, b_spec, b_spec],
        out_specs=(o_spec, o_spec, o_spec),
        compiler_params=pltpu.CompilerParams(
            dimension_semantics=("parallel",),
            vmem_limit_bytes=VMEM_LIMIT),
    )(x2d, wq, wk, wv, bq, bk, bv)


def _linear_kernel(x_ref, w_ref, b_ref, o_ref):
    y = jax.lax.dot_general(x_ref[...].astype(jnp.bfloat16), w_ref[...],
                            dimension_numbers=(((1,), (1,)), ((), ())),
                            preferred_element_type=jnp.float32)
    o_ref[...] = (y + b_ref[...]).astype(o_ref.dtype)


def linear_pallas(x2d, w_bf16, b_f32, out_dtype=jnp.float32, row_tile=1024):
    """y = x @ w.T + b (PyTorch nn.Linear), bf16 MXU inputs, f32 accumulate."""
    N, Cin = x2d.shape
    Cout = w_bf16.shape[0]
    tn = N if N <= row_tile else max(8, (row_tile // 8) * 8)
    return pl.pallas_call(
        _linear_kernel,
        out_shape=jax.ShapeDtypeStruct((N, Cout), out_dtype),
        grid=(pl.cdiv(N, tn),),
        in_specs=[pl.BlockSpec((tn, Cin), lambda i: (i, 0)),
                  pl.BlockSpec((Cout, Cin), lambda i: (0, 0)),
                  pl.BlockSpec((1, Cout), lambda i: (0, 0))],
        out_specs=pl.BlockSpec((tn, Cout), lambda i: (i, 0)),
        compiler_params=pltpu.CompilerParams(
            dimension_semantics=("parallel",),
            vmem_limit_bytes=VMEM_LIMIT),
    )(x2d, w_bf16, b_f32)


# ---------------------------------------------------------------------------
# Neighborhood attention (fused splits, band formulation), dilation = 1
# ---------------------------------------------------------------------------

def _head_partition(num_heads, num_splits):
    base = num_heads // num_splits
    if num_heads % num_splits == 0:
        return [base] * num_splits
    diff = num_heads - num_splits * base
    return [base] * (num_splits - diff) + [base + 1] * diff


def _pick_row_tile(H, W, C, splits, max_q_rows=1024, vmem_budget=VMEM_LIMIT):
    """Largest tq (divisor of H, tq*W multiple of 8 unless tq == H) whose
    working set fits comfortably in the scoped-VMEM budget."""
    HW = H * W
    cands = [t for t in range(1, H + 1)
             if H % t == 0 and ((t * W) % 8 == 0 or t == H)]
    kv_resident = 2 * 2 * HW * C * 2              # k + v, double-buffered, bf16

    def footprint(t):
        tqw = t * W
        io = 2 * 2 * tqw * C * 2                  # q block + out block, dbl-buf bf16
        bias = 0
        scratch = 0
        for ksz, hs, _ in splits:
            bw = min(t + ksz - 1, H) * W
            bias += 2 * hs * tqw * bw * 2         # dbl-buffered bf16 bias block
            scratch = max(scratch, 3 * tqw * bw * 4)   # f32 logits / p temporaries
        return kv_resident + io + bias + scratch

    fitting = [t for t in cands
               if t * W <= max_q_rows and footprint(t) <= 0.7 * vmem_budget]
    if fitting:
        return max(fitting)
    small = [t for t in cands if footprint(t) <= 0.7 * vmem_budget]
    return min(small) if small else min(cands)


def _dedup_row_blocks(H, ksz, tq):
    """Group query-row blocks whose (bias + mask) tables are identical.
    Returns (representative rows, blk_of_r map)."""
    ns = ksz // 2
    band_h = min(tq + ksz - 1, H)
    num_qr = H // tq
    sig_to_blk, rep_rows, blk_of_r = {}, [], []
    for r in range(num_qr):
        bs = min(max(r * tq - ns, 0), H - band_h)
        c = bs - r * tq
        e = tuple(min(max(r * tq + t - ns, 0), H - ksz) - bs for t in range(tq))
        sig = (c, e)
        if sig not in sig_to_blk:
            sig_to_blk[sig] = len(rep_rows)
            rep_rows.append(r)
        blk_of_r.append(sig_to_blk[sig])
    return rep_rows, blk_of_r


def _build_band_bias(rpb, H, W, ksz, tq, rep_rows):
    """Additive table combining relative positional bias and the neighborhood
    mask (-1e30 outside the window), bf16.
    Shape (n_blk, hs, tq*W, band_h*W); one block per distinct row-block pattern."""
    hs = rpb.shape[0]
    ns = ksz // 2
    band_h = min(tq + ksz - 1, H)

    qr = jnp.asarray(rep_rows, jnp.int32)                               # (nblk,)
    band_start = jnp.clip(qr * tq - ns, 0, H - band_h)                  # (nblk,)
    i_glob = qr[:, None] * tq + jnp.arange(tq)[None, :]                 # (nblk, tq)
    sr = jnp.clip(i_glob - ns, 0, H - ksz)                              # window row start
    key_row = band_start[:, None] + jnp.arange(band_h)[None, :]         # (nblk, band_h)

    row_valid = ((key_row[:, None, :] >= sr[:, :, None]) &
                 (key_row[:, None, :] < sr[:, :, None] + ksz))          # (nblk, tq, band_h)
    row_rel = jnp.clip(key_row[:, None, :] - i_glob[:, :, None] + (ksz - 1),
                       0, 2 * ksz - 2)                                  # (nblk, tq, band_h)

    jq = jnp.arange(W)
    sc = jnp.clip(jq - ns, 0, W - ksz)                                  # (W,)
    jk = jnp.arange(W)
    col_valid = ((jk[None, :] >= sc[:, None]) &
                 (jk[None, :] < sc[:, None] + ksz))                     # (W, W)
    col_rel = jnp.clip(jk[None, :] - jq[:, None] + (ksz - 1),
                       0, 2 * ksz - 2)                                  # (W, W)

    valid = (row_valid[:, :, None, :, None] &
             col_valid[None, None, :, None, :])                         # (nblk, tq, W, band_h, W)
    bias = rpb[:, row_rel[:, :, None, :, None],
               col_rel[None, None, :, None, :]]                         # (hs, nblk, tq, W, band_h, W)
    table = jnp.where(valid[None], bias, jnp.float32(-1e30)).astype(jnp.bfloat16)
    table = table.reshape(hs, len(rep_rows), tq * W, band_h * W)
    return jnp.transpose(table, (1, 0, 2, 3))                           # (nblk, hs, tqW, band_w)


def _make_na_kernel(splits, H, W, hd, tq):
    num_splits = len(splits)

    def kernel(map_ref, q_ref, k_ref, v_ref, *rest):
        # map_ref:  SMEM (num_splits*num_qr,) int32  (used only by index_maps)
        # q_ref:    (tq*W, C) bf16   pre-scaled query row block
        # k_ref/v_ref: (H*W, C) bf16 resident per batch element
        # bias_s:   (hs_s, tq*W, band_w_s) bf16   rpb + (-1e30) mask
        # o_ref:    (tq*W, C) bf16
        del map_ref
        bias_refs = rest[:num_splits]
        o_ref = rest[num_splits]
        r = pl.program_id(1)

        for s, (ksz, hs_s, h0) in enumerate(splits):        # static per split
            ns = ksz // 2
            band_h = min(tq + ksz - 1, H)
            band_w = band_h * W
            band_start = jnp.clip(r * tq - ns, 0, H - band_h)
            off = band_start * W
            if W % 8 == 0:
                off = pl.multiple_of(off, 8)                 # sublane-aligned slice
            bias_s = bias_refs[s]

            for j in range(hs_s):                            # static per head
                c = (h0 + j) * hd
                qh = q_ref[:, c:c + hd]                                  # (tqW, hd)
                kh = k_ref[pl.ds(off, band_w), c:c + hd]                 # (band_w, hd)
                vh = v_ref[pl.ds(off, band_w), c:c + hd]                 # (band_w, hd)
                logits = jax.lax.dot_general(
                    qh, kh, dimension_numbers=(((1,), (1,)), ((), ())),
                    preferred_element_type=jnp.float32)                  # (tqW, band_w)
                logits = logits + bias_s[j].astype(jnp.float32)
                # masked softmax in f32 (masked keys underflow to exactly 0)
                m = jnp.max(logits, axis=-1, keepdims=True)
                p = jnp.exp(logits - m)
                denom = jnp.sum(p, axis=-1, keepdims=True)
                oh = jnp.dot(p.astype(jnp.bfloat16), vh,
                             preferred_element_type=jnp.float32)         # (tqW, hd)
                # direct store into this head's lane slice of the full-C block
                o_ref[:, c:c + hd] = (oh * pl.reciprocal(denom, approx=True)
                                      ).astype(o_ref.dtype)

    return kernel


def na_fused_pallas(q, k, v, map_arr, biases, splits, H, W, hd, tq):
    """q, k, v: (B, H*W, C) bf16 (q pre-scaled).  Returns (B, H*W, C) bf16."""
    B, HW, C = q.shape
    num_qr = H // tq

    in_specs = [
        pl.BlockSpec((None, tq * W, C), lambda b, r, m: (b, r, 0)),
        pl.BlockSpec((None, HW, C), lambda b, r, m: (b, 0, 0)),   # resident K
        pl.BlockSpec((None, HW, C), lambda b, r, m: (b, 0, 0)),   # resident V
    ]
    for s, (ksz, hs_s, _) in enumerate(splits):
        band_w = min(tq + ksz - 1, H) * W
        # bias is batch-independent; dedup map picks the edge/interior block so
        # interior steps keep the same block index (stays VMEM-resident).
        in_specs.append(pl.BlockSpec(
            (None, hs_s, tq * W, band_w),
            lambda b, r, m, s=s: (m[s * num_qr + r], 0, 0, 0)))

    kernel = _make_na_kernel(splits, H, W, hd, tq)
    return pl.pallas_call(
        kernel,
        out_shape=jax.ShapeDtypeStruct((B, HW, C), jnp.bfloat16),
        grid_spec=pltpu.PrefetchScalarGridSpec(
            num_scalar_prefetch=1,
            grid=(B, num_qr),
            in_specs=in_specs,
            out_specs=pl.BlockSpec((None, tq * W, C), lambda b, r, m: (b, r, 0))),
        compiler_params=pltpu.CompilerParams(
            # both axes produce disjoint output blocks -> shard over both TCs (v7x)
            dimension_semantics=("parallel", "parallel"),
            vmem_limit_bytes=VMEM_LIMIT),
    )(map_arr, q, k, v, *biases)


# ---------------------------------------------------------------------------
# Module setup + forward (wrapper glue around the Pallas kernels)
# ---------------------------------------------------------------------------

def prepare_module(params, dim, num_heads, kernel_sizes, dilations, H, W,
                   max_q_rows=1024):
    """One-time conversion: bf16 weights with folded q-scale, head partition,
    row tile, deduplicated bf16 bias tables and the scalar-prefetch block map."""
    C = dim
    hd = C // num_heads
    scale = float(hd) ** (-0.5)
    num_splits = len(kernel_sizes)
    # TODO(synk): dilated neighborhoods (dilation > 1) are not implemented.
    assert all(d == 1 for d in dilations), "only dilation=1 is supported"
    assert H >= max(kernel_sizes) and W >= max(kernel_sizes)

    shapes = _head_partition(num_heads, num_splits)
    splits, h0 = [], 0
    for hs, ksz in zip(shapes, kernel_sizes):
        splits.append((ksz, hs, h0))
        h0 += hs

    tq = _pick_row_tile(H, W, C, splits, max_q_rows=max_q_rows)
    num_qr = H // tq

    biases, blk_map = [], []
    for (ksz, hs, _), rpb in zip(splits, params['rpb']):
        rep_rows, blk_of_r = _dedup_row_blocks(H, ksz, tq)
        biases.append(_build_band_bias(rpb.astype(jnp.float32), H, W, ksz, tq,
                                       rep_rows))
        blk_map.extend(blk_of_r)

    qkv_w = params['qkv_w'].astype(jnp.float32)
    qkv_b = params['qkv_b'].astype(jnp.float32)
    return dict(
        # 1/sqrt(hd) folded into the q rows of the qkv weight and bias
        wq=(qkv_w[:C] * scale).astype(jnp.bfloat16),
        wk=qkv_w[C:2 * C].astype(jnp.bfloat16),
        wv=qkv_w[2 * C:].astype(jnp.bfloat16),
        bq=(qkv_b[:C] * scale).reshape(1, C).astype(jnp.float32),
        bk=qkv_b[C:2 * C].reshape(1, C).astype(jnp.float32),
        bv=qkv_b[2 * C:].reshape(1, C).astype(jnp.float32),
        wp=params['proj_w'].astype(jnp.bfloat16),
        bp=params['proj_b'].reshape(1, C).astype(jnp.float32),
        splits=tuple(splits), tq=tq, num_qr=num_qr,
        map_arr=jnp.asarray(blk_map, jnp.int32),
        biases=tuple(biases),
        H=H, W=W, C=C, hd=hd)


def hydra_neighborhood_attention(x, mod):
    B, H, W, C = x.shape
    assert (H, W, C) == (mod['H'], mod['W'], mod['C'])
    N = B * H * W
    HW = H * W

    # qkv linear: three bf16 outputs, q pre-scaled, no HBM transpose afterwards.
    q, k, v = qkv_linear_pallas(x.reshape(N, C),
                                mod['wq'], mod['wk'], mod['wv'],
                                mod['bq'], mod['bk'], mod['bv'])

    attn = na_fused_pallas(q.reshape(B, HW, C), k.reshape(B, HW, C),
                           v.reshape(B, HW, C), mod['map_arr'], mod['biases'],
                           mod['splits'], H, W, mod['hd'], mod['tq'])

    # attn_drop / proj_drop: p = 0.0 -> identity (eval semantics)
    out = linear_pallas(attn.reshape(N, C), mod['wp'], mod['bp'],
                        out_dtype=jnp.float32)
    return out.reshape(B, H, W, C)


# ---------------------------------------------------------------------------
# Pure-JAX f32 reference (sanity check only)
# ---------------------------------------------------------------------------

def _na_geometry(H, W, ksz):
    ns = ksz // 2
    start_h = jnp.clip(jnp.arange(H) - ns, 0, H - ksz)
    start_w = jnp.clip(jnp.arange(W) - ns, 0, W - ksz)
    nh = start_h[:, None] + jnp.arange(ksz)[None, :]
    nw = start_w[:, None] + jnp.arange(ksz)[None, :]
    bi = nh - jnp.arange(H)[:, None] + (ksz - 1)
    bj = nw - jnp.arange(W)[:, None] + (ksz - 1)
    return nh, nw, bi, bj


def reference_forward(x, params, kernel_sizes, dilations, num_heads):
    B, H, W, C = x.shape
    head_dim = C // num_heads
    scale = head_dim ** (-0.5)
    num_splits = len(kernel_sizes)
    qkv = x.reshape(B * H * W, C) @ params['qkv_w'].T + params['qkv_b']
    qkv = qkv.reshape(B, H, W, 3, num_heads, head_dim)
    qkv = jnp.transpose(qkv, (3, 0, 4, 1, 2, 5))
    q, k, v = qkv[0] * scale, qkv[1], qkv[2]
    shapes = _head_partition(num_heads, num_splits)
    outs, h0 = [], 0
    for hs, ksz, dil, rpb in zip(shapes, kernel_sizes, dilations, params['rpb']):
        qs, ks, vs = q[:, h0:h0 + hs], k[:, h0:h0 + hs], v[:, h0:h0 + hs]
        h0 += hs
        nh, nw, bi, bj = _na_geometry(H, W, ksz)
        kn = ks[:, :, nh[:, None, :, None], nw[None, :, None, :], :]
        vn = vs[:, :, nh[:, None, :, None], nw[None, :, None, :], :]
        bias = rpb[:, bi[:, None, :, None], bj[None, :, None, :]]
        logits = jnp.einsum('bhijd,bhijkld->bhijkl', qs, kn) + bias[None]
        KK = ksz * ksz
        attn = jax.nn.softmax(logits.reshape(B, hs, H, W, KK), axis=-1)
        o = jnp.einsum('bhijp,bhijpd->bhijd', attn,
                       vn.reshape(B, hs, H, W, KK, head_dim))
        outs.append(o)
    xo = jnp.concatenate(outs, axis=1)
    xo = jnp.transpose(xo, (0, 2, 3, 1, 4)).reshape(B, H, W, C)
    out = xo.reshape(B * H * W, C) @ params['proj_w'].T + params['proj_b']
    return out.reshape(B, H, W, C)


# ---------------------------------------------------------------------------

if __name__ == "__main__":
    B, H, W = 2, 16, 16
    dim = 32
    num_heads = 4
    kernel_sizes = [3, 5]
    dilations = [1]

    # Replicate kernel_sizes / dilations handling exactly like the PyTorch __init__.
    if len(kernel_sizes) == 1 and len(dilations) != 1:
        kernel_sizes = [kernel_sizes[0]] * len(dilations)
    elif len(dilations) == 1 and len(kernel_sizes) != 1:
        dilations = [dilations[0]] * len(kernel_sizes)
    assert len(kernel_sizes) == len(dilations)
    assert all(k > 1 and k % 2 == 1 for k in kernel_sizes)
    num_splits = len(kernel_sizes)
    shapes = _head_partition(num_heads, num_splits)

    key = jax.random.PRNGKey(0)
    keys = jax.random.split(key, 6 + num_splits)
    x = jax.random.normal(keys[0], (B, H, W, dim), jnp.float32)

    params = {
        # nn.Linear(dim, 3*dim): weight (3*dim, dim), bias (3*dim,)
        'qkv_w': jax.random.normal(keys[1], (3 * dim, dim), jnp.float32) * 0.02,
        'qkv_b': jax.random.normal(keys[2], (3 * dim,), jnp.float32) * 0.02,
        # nn.Linear(dim, dim)
        'proj_w': jax.random.normal(keys[3], (dim, dim), jnp.float32) * 0.02,
        'proj_b': jax.random.normal(keys[4], (dim,), jnp.float32) * 0.02,
        # rpb: one (heads_in_split, 2k-1, 2k-1) table per split
        'rpb': [jax.random.normal(keys[5 + i], (hs, 2 * k - 1, 2 * k - 1),
                                  jnp.float32) * 0.02
                for i, (hs, k) in enumerate(zip(shapes, kernel_sizes))],
    }

    mod = prepare_module(params, dim, num_heads, kernel_sizes, dilations, H, W)
    out = jax.block_until_ready(hydra_neighborhood_attention(x, mod))
    assert out.shape == (B, H, W, dim)

    # Sanity check against a pure-JAX f32 reference (kernel path is bf16
    # activations + bf16 MXU matmuls with f32 accumulation/softmax).
    ref = jax.block_until_ready(
        reference_forward(x, params, kernel_sizes, dilations, num_heads))
    err = float(jnp.max(jnp.abs(out - ref)))
    assert err < 1e-2, f"max abs diff {err}"

    # Also exercise the multi-row-block band + bias-dedup path with small tiles.
    mod_small = prepare_module(params, dim, num_heads, kernel_sizes, dilations,
                               H, W, max_q_rows=64)
    out2 = jax.block_until_ready(hydra_neighborhood_attention(x, mod_small))
    err2 = float(jnp.max(jnp.abs(out2 - ref)))
    assert err2 < 1e-2, f"max abs diff {err2}"

    print("KERNEL_OK")
</pallas_src>

<mosaic_0001>
module attributes {stable_mosaic.version = 11 : i64} {
  func.func @_qkv_kernel(%arg0: i32, %arg1: memref<512x32xf32, #tpu.memory_space<vmem>>, %arg2: memref<32x32xbf16, #tpu.memory_space<vmem>>, %arg3: memref<32x32xbf16, #tpu.memory_space<vmem>>, %arg4: memref<32x32xbf16, #tpu.memory_space<vmem>>, %arg5: memref<1x32xf32, #tpu.memory_space<vmem>>, %arg6: memref<1x32xf32, #tpu.memory_space<vmem>>, %arg7: memref<1x32xf32, #tpu.memory_space<vmem>>, %arg8: memref<512x32xbf16, #tpu.memory_space<vmem>>, %arg9: memref<512x32xbf16, #tpu.memory_space<vmem>>, %arg10: memref<512x32xbf16, #tpu.memory_space<vmem>>) attributes {dimension_semantics = [#tpu.dimension_semantics<parallel>], iteration_bounds = array<i64: 1>, scalar_prefetch = 0 : i64, scratch_operands = 0 : i64, tpu.core_type = #tpu.core_type<tc>, window_params = [{transform_indices = @transform_0, window_bounds = array<i64: 512, 32>}, {pipeline_mode = #tpu.pipeline_mode<synchronous>, transform_indices = @transform_1, window_bounds = array<i64: 32, 32>}, {pipeline_mode = #tpu.pipeline_mode<synchronous>, transform_indices = @transform_2, window_bounds = array<i64: 32, 32>}, {pipeline_mode = #tpu.pipeline_mode<synchronous>, transform_indices = @transform_3, window_bounds = array<i64: 32, 32>}, {pipeline_mode = #tpu.pipeline_mode<synchronous>, transform_indices = @transform_4, window_bounds = array<i64: 1, 32>}, {pipeline_mode = #tpu.pipeline_mode<synchronous>, transform_indices = @transform_5, window_bounds = array<i64: 1, 32>}, {pipeline_mode = #tpu.pipeline_mode<synchronous>, transform_indices = @transform_6, window_bounds = array<i64: 1, 32>}, {transform_indices = @transform_7, window_bounds = array<i64: 512, 32>}, {transform_indices = @transform_8, window_bounds = array<i64: 512, 32>}, {transform_indices = @transform_9, window_bounds = array<i64: 512, 32>}]} {
    %c0 = arith.constant 0 : index
    %c0_0 = arith.constant 0 : index
    %0 = vector.load %arg1[%c0, %c0_0] : memref<512x32xf32, #tpu.memory_space<vmem>>, vector<512x32xf32>
    %1 = arith.truncf %0 : vector<512x32xf32> to vector<512x32xbf16>
    %c0_1 = arith.constant 0 : index
    %c0_2 = arith.constant 0 : index
    %2 = vector.load %arg2[%c0_1, %c0_2] : memref<32x32xbf16, #tpu.memory_space<vmem>>, vector<32x32xbf16>
    %cst = arith.constant dense<0.000000e+00> : vector<512x32xf32>
    %3 = tpu.matmul %1, %2, %cst {dimension_numbers = #tpu.dot_dimension_numbers<[1], [1], [0], [0], [0, 0, 1, 0], [], []>} : vector<512x32xbf16>, vector<32x32xbf16>, vector<512x32xf32> -> vector<512x32xf32>
    %c0_3 = arith.constant 0 : index
    %c0_4 = arith.constant 0 : index
    %4 = vector.load %arg5[%c0_3, %c0_4] : memref<1x32xf32, #tpu.memory_space<vmem>>, vector<1x32xf32>
    %5 = vector.broadcast %4 : vector<1x32xf32> to vector<512x32xf32>
    %6 = arith.addf %3, %5 : vector<512x32xf32>
    %7 = arith.truncf %6 : vector<512x32xf32> to vector<512x32xbf16>
    %c0_5 = arith.constant 0 : index
    %c0_6 = arith.constant 0 : index
    %8 = vector.load %arg8[%c0_5, %c0_6] : memref<512x32xbf16, #tpu.memory_space<vmem>>, vector<512x32xbf16>
    tpu.vector_store %arg8[%c0_5, %c0_6], %7 {strides = array<i32>} : memref<512x32xbf16, #tpu.memory_space<vmem>>, vector<512x32xbf16>,
    %c0_7 = arith.constant 0 : index
    %c0_8 = arith.constant 0 : index
    %9 = vector.load %arg3[%c0_7, %c0_8] : memref<32x32xbf16, #tpu.memory_space<vmem>>, vector<32x32xbf16>
    %cst_9 = arith.constant dense<0.000000e+00> : vector<512x32xf32>
    %10 = tpu.matmul %1, %9, %cst_9 {dimension_numbers = #tpu.dot_dimension_numbers<[1], [1], [0], [0], [0, 0, 1, 0], [], []>} : vector<512x32xbf16>, vector<32x32xbf16>, vector<512x32xf32> -> vector<512x32xf32>
    %c0_10 = arith.constant 0 : index
    %c0_11 = arith.constant 0 : index
    %11 = vector.load %arg6[%c0_10, %c0_11] : memref<1x32xf32, #tpu.memory_space<vmem>>, vector<1x32xf32>
    %12 = vector.broadcast %11 : vector<1x32xf32> to vector<512x32xf32>
    %13 = arith.addf %10, %12 : vector<512x32xf32>
    %14 = arith.truncf %13 : vector<512x32xf32> to vector<512x32xbf16>
    %c0_12 = arith.constant 0 : index
    %c0_13 = arith.constant 0 : index
    %15 = vector.load %arg9[%c0_12, %c0_13] : memref<512x32xbf16, #tpu.memory_space<vmem>>, vector<512x32xbf16>
    tpu.vector_store %arg9[%c0_12, %c0_13], %14 {strides = array<i32>} : memref<512x32xbf16, #tpu.memory_space<vmem>>, vector<512x32xbf16>,
    %c0_14 = arith.constant 0 : index
    %c0_15 = arith.constant 0 : index
    %16 = vector.load %arg4[%c0_14, %c0_15] : memref<32x32xbf16, #tpu.memory_space<vmem>>, vector<32x32xbf16>
    %cst_16 = arith.constant dense<0.000000e+00> : vector<512x32xf32>
    %17 = tpu.matmul %1, %16, %cst_16 {dimension_numbers = #tpu.dot_dimension_numbers<[1], [1], [0], [0], [0, 0, 1, 0], [], []>} : vector<512x32xbf16>, vector<32x32xbf16>, vector<512x32xf32> -> vector<512x32xf32>
    %c0_17 = arith.constant 0 : index
    %c0_18 = arith.constant 0 : index
    %18 = vector.load %arg7[%c0_17, %c0_18] : memref<1x32xf32, #tpu.memory_space<vmem>>, vector<1x32xf32>
    %19 = vector.broadcast %18 : vector<1x32xf32> to vector<512x32xf32>
    %20 = arith.addf %17, %19 : vector<512x32xf32>
    %21 = arith.truncf %20 : vector<512x32xf32> to vector<512x32xbf16>
    %c0_19 = arith.constant 0 : index
    %c0_20 = arith.constant 0 : index
    %22 = vector.load %arg10[%c0_19, %c0_20] : memref<512x32xbf16, #tpu.memory_space<vmem>>, vector<512x32xbf16>
    tpu.vector_store %arg10[%c0_19, %c0_20], %21 {strides = array<i32>} : memref<512x32xbf16, #tpu.memory_space<vmem>>, vector<512x32xbf16>,
    return
  }
  func.func @transform_0(%arg0: i32) -> (i32, i32) {
    %c0_i32 = arith.constant 0 : i32
    %c0_i32_0 = arith.constant 0 : i32
    return %arg0, %c0_i32 : i32, i32
  }
  func.func @transform_1(%arg0: i32) -> (i32, i32) {
    %c0_i32 = arith.constant 0 : i32
    %c0_i32_0 = arith.constant 0 : i32
    %c0_i32_1 = arith.constant 0 : i32
    return %c0_i32, %c0_i32_0 : i32, i32
  }
  func.func @transform_2(%arg0: i32) -> (i32, i32) {
    %c0_i32 = arith.constant 0 : i32
    %c0_i32_0 = arith.constant 0 : i32
    %c0_i32_1 = arith.constant 0 : i32
    return %c0_i32, %c0_i32_0 : i32, i32
  }
  func.func @transform_3(%arg0: i32) -> (i32, i32) {
    %c0_i32 = arith.constant 0 : i32
    %c0_i32_0 = arith.constant 0 : i32
    %c0_i32_1 = arith.constant 0 : i32
    return %c0_i32, %c0_i32_0 : i32, i32
  }
  func.func @transform_4(%arg0: i32) -> (i32, i32) {
    %c0_i32 = arith.constant 0 : i32
    %c0_i32_0 = arith.constant 0 : i32
    %c0_i32_1 = arith.constant 0 : i32
    return %c0_i32, %c0_i32_0 : i32, i32
  }
  func.func @transform_5(%arg0: i32) -> (i32, i32) {
    %c0_i32 = arith.constant 0 : i32
    %c0_i32_0 = arith.constant 0 : i32
    %c0_i32_1 = arith.constant 0 : i32
    return %c0_i32, %c0_i32_0 : i32, i32
  }
  func.func @transform_6(%arg0: i32) -> (i32, i32) {
    %c0_i32 = arith.constant 0 : i32
    %c0_i32_0 = arith.constant 0 : i32
    %c0_i32_1 = arith.constant 0 : i32
    return %c0_i32, %c0_i32_0 : i32, i32
  }
  func.func @transform_7(%arg0: i32) -> (i32, i32) {
    %c0_i32 = arith.constant 0 : i32
    %c0_i32_0 = arith.constant 0 : i32
    return %arg0, %c0_i32 : i32, i32
  }
  func.func @transform_8(%arg0: i32) -> (i32, i32) {
    %c0_i32 = arith.constant 0 : i32
    %c0_i32_0 = arith.constant 0 : i32
    return %arg0, %c0_i32 : i32, i32
  }
  func.func @transform_9(%arg0: i32) -> (i32, i32) {
    %c0_i32 = arith.constant 0 : i32
    %c0_i32_0 = arith.constant 0 : i32
    return %arg0, %c0_i32 : i32, i32
  }
}

</mosaic_0001>

<llo_original>
// kernel: tpu_custom_call.1
$region0: #{tpu_custom_call.1}
  #allocation0 [shape = 'u32[]', space=smem, size = 0x4, offset = 0x4, fixed_abs, tag = 'smem constant byte address 0x4 - core index']
  #allocation1 [shape = 'u32[144,128]{1,0:T(1,128)}', space=vmem, size = 0x12000, scoped, tag = 'internal scratch']
  %s0 = inlined_call_operand.vmem [shape: f32[512,32], index: 0, kind: input, shape index: {}]
  %s1 = inlined_call_operand.vmem [shape: bf16[32,32], index: 1, kind: input, shape index: {}]
  %s2 = inlined_call_operand.vmem [shape: bf16[32,32], index: 2, kind: input, shape index: {}]
  %s3 = inlined_call_operand.vmem [shape: bf16[32,32], index: 3, kind: input, shape index: {}]
  %s4 = inlined_call_operand.vmem [shape: f32[1,32], index: 4, kind: input, shape index: {}]
  %s5 = inlined_call_operand.vmem [shape: f32[1,32], index: 5, kind: input, shape index: {}]
  %s6 = inlined_call_operand.vmem [shape: f32[1,32], index: 6, kind: input, shape index: {}]
  %s7 = inlined_call_operand.vmem [shape: bf16[512,32], index: 7, kind: output, shape index: {0}]
  %s8 = inlined_call_operand.vmem [shape: bf16[512,32], index: 8, kind: output, shape index: {1}]
  %s9 = inlined_call_operand.vmem [shape: bf16[512,32], index: 9, kind: output, shape index: {2}]
  %10 = xla_tuple %s7, %s8, %s9
  %s11 = sld [smem:[#allocation0]]
  $region54: #{tpu_custom_call.1} parent=0
    _
  %s13 = ssub.s32 1, %s11
  %s14 = scalar_select 0, %s13, %s11
  // Predicated region
  $region2: #{tpu_custom_call.1} parent=0 // pred_check
    _
  $region3: #{tpu_custom_call.1} parent=0 // pred_check_branch
    %16 = sbr.rel (0) target = $region5
  $region4: #{tpu_custom_call.1} parent=0 // pred_region
    _
  $region5: #{tpu_custom_call.1} parent=0 // pred_fallthru
    _
  // Predicated region
  $region6: #{tpu_custom_call.1} parent=0 // pred_check
    _
  $region7: #{tpu_custom_call.1} parent=0 // pred_check_branch
    %18 = sbr.rel (0) target = $region9
  $region8: #{tpu_custom_call.1} parent=0 // pred_region
    _
  $region9: #{tpu_custom_call.1} parent=0 // pred_fallthru
    _
  // Predicated region
  $region10: #{tpu_custom_call.1} parent=0 // pred_check
    _
  $region11: #{tpu_custom_call.1} parent=0 // pred_check_branch
    %20 = sbr.rel (0) target = $region13
  $region12: #{tpu_custom_call.1} parent=0 // pred_region
    _
  $region13: #{tpu_custom_call.1} parent=0 // pred_fallthru
    _
  // Predicated region
  $region14: #{tpu_custom_call.1} parent=0 // pred_check
    _
  $region15: #{tpu_custom_call.1} parent=0 // pred_check_branch
    %22 = sbr.rel (0) target = $region17
  $region16: #{tpu_custom_call.1} parent=0 // pred_region
    _
  $region17: #{tpu_custom_call.1} parent=0 // pred_fallthru
    _
  // Predicated region
  $region18: #{tpu_custom_call.1} parent=0 // pred_check
    _
  $region19: #{tpu_custom_call.1} parent=0 // pred_check_branch
    %24 = sbr.rel (0) target = $region21
  $region20: #{tpu_custom_call.1} parent=0 // pred_region
    _
  $region21: #{tpu_custom_call.1} parent=0 // pred_fallthru
    _
  // Predicated region
  $region22: #{tpu_custom_call.1} parent=0 // pred_check
    _
  $region23: #{tpu_custom_call.1} parent=0 // pred_check_branch
    %26 = sbr.rel (0) target = $region25
  $region24: #{tpu_custom_call.1} parent=0 // pred_region
    _
  $region25: #{tpu_custom_call.1} parent=0 // pred_fallthru
    _
  // Predicated region
  $region26: #{tpu_custom_call.1} parent=0 // pred_check
    _
  $region27: #{tpu_custom_call.1} parent=0 // pred_check_branch
    %28 = sbr.rel (0) target = $region29
  $region28: #{tpu_custom_call.1} parent=0 // pred_region
    _
  $region29: #{tpu_custom_call.1} parent=0 // pred_fallthru
    _
  %v30 = vld [vmem:[%s0] sm:$0xff]
  %v31 = vld [vmem:[%s0 + $0x8] sm:$0xff]
  %v32 = vld [vmem:[%s0 + $0x10] sm:$0xff]
  %v33 = vld [vmem:[%s0 + $0x18] sm:$0xff]
  %v34 = vld [vmem:[%s0 + $0x20] sm:$0xff]
  %v35 = vld [vmem:[%s0 + $0x28] sm:$0xff]
  %v36 = vld [vmem:[%s0 + $0x30] sm:$0xff]
  %v37 = vld [vmem:[%s0 + $0x38] sm:$0xff]
  %v38 = vld [vmem:[%s0 + $0x40] sm:$0xff]
  %v39 = vld [vmem:[%s0 + $0x48] sm:$0xff]
  %v40 = vld [vmem:[%s0 + $0x50] sm:$0xff]
  %v41 = vld [vmem:[%s0 + $0x58] sm:$0xff]
  %v42 = vld [vmem:[%s0 + $0x60] sm:$0xff]
  %v43 = vld [vmem:[%s0 + $0x68] sm:$0xff]
  %v44 = vld [vmem:[%s0 + $0x70] sm:$0xff]
  %v45 = vld [vmem:[%s0 + $0x78] sm:$0xff]
  %v46 = vld [vmem:[%s0 + $0x80] sm:$0xff]
  %v47 = vld [vmem:[%s0 + $0x88] sm:$0xff]
  %v48 = vld [vmem:[%s0 + $0x90] sm:$0xff]
  %v49 = vld [vmem:[%s0 + $0x98] sm:$0xff]
  %v50 = vld [vmem:[%s0 + $0xa0] sm:$0xff]
  %v51 = vld [vmem:[%s0 + $0xa8] sm:$0xff]
  %v52 = vld [vmem:[%s0 + $0xb0] sm:$0xff]
  %v53 = vld [vmem:[%s0 + $0xb8] sm:$0xff]
  %v54 = vld [vmem:[%s0 + $0xc0] sm:$0xff]
  %v55 = vld [vmem:[%s0 + $0xc8] sm:$0xff]
  %v56 = vld [vmem:[%s0 + $0xd0] sm:$0xff]
  %v57 = vld [vmem:[%s0 + $0xd8] sm:$0xff]
  %v58 = vld [vmem:[%s0 + $0xe0] sm:$0xff]
  %v59 = vld [vmem:[%s0 + $0xe8] sm:$0xff]
  %v60 = vld [vmem:[%s0 + $0xf0] sm:$0xff]
  %v61 = vld [vmem:[%s0 + $0xf8] sm:$0xff]
  %v62 = vld [vmem:[%s0 + $0x100] sm:$0xff]
  %v63 = vld [vmem:[%s0 + $0x108] sm:$0xff]
  %v64 = vld [vmem:[%s0 + $0x110] sm:$0xff]
  %v65 = vld [vmem:[%s0 + $0x118] sm:$0xff]
  %v66 = vld [vmem:[%s0 + $0x120] sm:$0xff]
  %v67 = vld [vmem:[%s0 + $0x128] sm:$0xff]
  %v68 = vld [vmem:[%s0 + $0x130] sm:$0xff]
  %v69 = vld [vmem:[%s0 + $0x138] sm:$0xff]
  %v70 = vld [vmem:[%s0 + $0x140] sm:$0xff]
  %v71 = vld [vmem:[%s0 + $0x148] sm:$0xff]
  %v72 = vld [vmem:[%s0 + $0x150] sm:$0xff]
  %v73 = vld [vmem:[%s0 + $0x158] sm:$0xff]
  %v74 = vld [vmem:[%s0 + $0x160] sm:$0xff]
  %v75 = vld [vmem:[%s0 + $0x168] sm:$0xff]
  %v76 = vld [vmem:[%s0 + $0x170] sm:$0xff]
  %v77 = vld [vmem:[%s0 + $0x178] sm:$0xff]
  %v78 = vld [vmem:[%s0 + $0x180] sm:$0xff]
  %v79 = vld [vmem:[%s0 + $0x188] sm:$0xff]
  %v80 = vld [vmem:[%s0 + $0x190] sm:$0xff]
  %v81 = vld [vmem:[%s0 + $0x198] sm:$0xff]
  %v82 = vld [vmem:[%s0 + $0x1a0] sm:$0xff]
  %v83 = vld [vmem:[%s0 + $0x1a8] sm:$0xff]
  %v84 = vld [vmem:[%s0 + $0x1b0] sm:$0xff]
  %v85 = vld [vmem:[%s0 + $0x1b8] sm:$0xff]
  %v86 = vld [vmem:[%s0 + $0x1c0] sm:$0xff]
  %v87 = vld [vmem:[%s0 + $0x1c8] sm:$0xff]
  %v88 = vld [vmem:[%s0 + $0x1d0] sm:$0xff]
  %v89 = vld [vmem:[%s0 + $0x1d8] sm:$0xff]
  %v90 = vld [vmem:[%s0 + $0x1e0] sm:$0xff]
  %v91 = vld [vmem:[%s0 + $0x1e8] sm:$0xff]
  %v92 = vld [vmem:[%s0 + $0x1f0] sm:$0xff]
  %v93 = vld [vmem:[%s0 + $0x1f8] sm:$0xff]
  %v94 = vpack.c.bf16 %v31, %v30
  %v95 = vpack.c.bf16 %v33, %v32
  %v96 = vpack.c.bf16 %v35, %v34
  %v97 = vpack.c.bf16 %v37, %v36
  %v98 = vpack.c.bf16 %v39, %v38
  %v99 = vpack.c.bf16 %v41, %v40
  %v100 = vpack.c.bf16 %v43, %v42
  %v101 = vpack.c.bf16 %v45, %v44
  %v102 = vpack.c.bf16 %v47, %v46
  %v103 = vpack.c.bf16 %v49, %v48
  %v104 = vpack.c.bf16 %v51, %v50
  %v105 = vpack.c.bf16 %v53, %v52
  %v106 = vpack.c.bf16 %v55, %v54
  %v107 = vpack.c.bf16 %v57, %v56
  %v108 = vpack.c.bf16 %v59, %v58
  %v109 = vpack.c.bf16 %v61, %v60
  %v110 = vpack.c.bf16 %v63, %v62
  %v111 = vpack.c.bf16 %v65, %v64
  %v112 = vpack.c.bf16 %v67, %v66
  %v113 = vpack.c.bf16 %v69, %v68
  %v114 = vpack.c.bf16 %v71, %v70
  %v115 = vpack.c.bf16 %v73, %v72
  %v116 = vpack.c.bf16 %v75, %v74
  %v117 = vpack.c.bf16 %v77, %v76
  %v118 = vpack.c.bf16 %v79, %v78
  %v119 = vpack.c.bf16 %v81, %v80
  %v120 = vpack.c.bf16 %v83, %v82
  %v121 = vpack.c.bf16 %v85, %v84
  %v122 = vpack.c.bf16 %v87, %v86
  %v123 = vpack.c.bf16 %v89, %v88
  %v124 = vpack.c.bf16 %v91, %v90
  %v125 = vpack.c.bf16 %v93, %v92
  %v126 = vld [vmem:[%s1] sm:$0xf]
  %v127 = vld [vmem:[%s1 + $0x4] sm:$0xf]
  %v128 = vld [vmem:[%s1 + $0x8] sm:$0xf]
  %v129 = vld [vmem:[%s1 + $0xc] sm:$0xf]
  %v130 = vld [vmem:[%s4] sm:$0x1]
  %v132 = vlaneseq
  %v133 = vshrl.u32 %v132, 7
  %v134 = vsub.s32 0, %v133
  %v135 = vrot.slane %v130, %v134
  %v141 = vunpack.c.l.b16 %v126
  %v142 = vunpack.c.l.b16 %v127
  %v143 = vunpack.c.l.b16 %v128
  %v144 = vunpack.c.l.b16 %v129
  %v145 = vpack.c.b16 %v142, %v141
  %v146 = vpack.c.b16 %v144, %v143
  %vm147 = vcmask 261120
  %v149 = vsel %vm147, %v94, 0
  %v152 = vsel %vm147, %v95, 0
  %v155 = vsel %vm147, %v96, 0
  %v158 = vsel %vm147, %v97, 0
  %v161 = vsel %vm147, %v98, 0
  %v164 = vsel %vm147, %v99, 0
  %v167 = vsel %vm147, %v100, 0
  %v170 = vsel %vm147, %v101, 0
  %v173 = vsel %vm147, %v102, 0
  %v176 = vsel %vm147, %v103, 0
  %v179 = vsel %vm147, %v104, 0
  %v182 = vsel %vm147, %v105, 0
  %v185 = vsel %vm147, %v106, 0
  %v188 = vsel %vm147, %v107, 0
  %v191 = vsel %vm147, %v108, 0
  %v194 = vsel %vm147, %v109, 0
  %v197 = vsel %vm147, %v110, 0
  %v200 = vsel %vm147, %v111, 0
  %v203 = vsel %vm147, %v112, 0
  %v206 = vsel %vm147, %v113, 0
  %v209 = vsel %vm147, %v114, 0
  %v212 = vsel %vm147, %v115, 0
  %v215 = vsel %vm147, %v116, 0
  %v218 = vsel %vm147, %v117, 0
  %v221 = vsel %vm147, %v118, 0
  %v224 = vsel %vm147, %v119, 0
  %v227 = vsel %vm147, %v120, 0
  %v230 = vsel %vm147, %v121, 0
  %v233 = vsel %vm147, %v122, 0
  %v236 = vsel %vm147, %v123, 0
  %v239 = vsel %vm147, %v124, 0
  %v242 = vsel %vm147, %v125, 0
  %v245 = vsel %vm147, %v145, 0
  %v248 = vsel %vm147, %v146, 0
  %250 = vmatprep.subr.bf16.mxu0 0
  %251 = vmatpush1.bf16.xpose.msra.mxu0 %v245
  %252 = vmatprep.subr.bf16.mxu0 0
  %253 = vmatpush1.bf16.xpose.msra.mxu0 %v248
  %254 = vmatprep.subr.bf16.mxu0 0
  %255 = vmatpush1.bf16.xpose.msra.mxu0 0
  %256 = vmatprep.subr.bf16.mxu0 0
  %257 = vmatpush1.bf16.xpose.msra.mxu0 0
  %258 = vmatprep.subr.bf16.mxu0 0
  %259 = vmatpush1.bf16.xpose.msra.mxu0 0
  %260 = vmatprep.subr.bf16.mxu0 0
  %261 = vmatpush1.bf16.xpose.msra.mxu0 0
  %262 = vmatprep.subr.bf16.mxu0 0
  %263 = vmatpush1.bf16.xpose.msra.mxu0 0
  %264 = vmatprep.subr.bf16.mxu0 0
  %265 = vmatpush1.bf16.xpose.msra.mxu0 0
  %266 = vmatprep.subr.bf16.mxu0 0
  %267 = vmatpush1.bf16.xpose.msra.mxu0 0
  %268 = vmatprep.subr.bf16.mxu0 0
  %269 = vmatpush1.bf16.xpose.msra.mxu0 0
  %270 = vmatprep.subr.bf16.mxu0 0
  %271 = vmatpush1.bf16.xpose.msra.mxu0 0
  %272 = vmatprep.subr.bf16.mxu0 0
  %273 = vmatpush1.bf16.xpose.msra.mxu0 0
  %274 = vmatprep.subr.bf16.mxu0 0
  %275 = vmatpush1.bf16.xpose.msra.mxu0 0
  %276 = vmatprep.subr.bf16.mxu0 0
  %277 = vmatpush1.bf16.xpose.msra.mxu0 0
  %278 = vmatprep.subr.bf16.mxu0 0
  %279 = vmatpush1.bf16.xpose.msra.mxu0 0
  %280 = vmatprep.subr.bf16.mxu0 0
  %281 = vmatpush1.bf16.xpose.msra.mxu0 0
  %282 = vmatprep.mubr.bf16.mxu0 0
  %283 = vmatmul.mubr.bf16.gmra.mrb[0].mxu0 %v149
  %v284 = vpop.f32.mrb[0].mxu0
  %v285 = vadd.f32 %v135, %v284
  %v286 = vpop.f32.mrb[0].mxu0
  %v287 = vpop.f32.mrb[0].mxu0
  %v288 = vadd.f32 %v135, %v287
  %v289 = vpop.f32.mrb[0].mxu0
  %290 = vmatprep.mubr.bf16.mxu0 0
  %291 = vmatmul.mubr.bf16.gmra.mrb[0].mxu0 %v152
  %v292 = vpop.f32.mrb[0].mxu0
  %v293 = vadd.f32 %v135, %v292
  %v294 = vpop.f32.mrb[0].mxu0
  %v295 = vpop.f32.mrb[0].mxu0
  %v296 = vadd.f32 %v135, %v295
  %v297 = vpop.f32.mrb[0].mxu0
  %298 = vmatprep.mubr.bf16.mxu0 0
  %299 = vmatmul.mubr.bf16.gmra.mrb[0].mxu0 %v155
  %v300 = vpop.f32.mrb[0].mxu0
  %v301 = vadd.f32 %v135, %v300
  %v302 = vpop.f32.mrb[0].mxu0
  %v303 = vpop.f32.mrb[0].mxu0
  %v304 = vadd.f32 %v135, %v303
  %v305 = vpop.f32.mrb[0].mxu0
  %306 = vmatprep.mubr.bf16.mxu0 0
  %307 = vmatmul.mubr.bf16.gmra.mrb[0].mxu0 %v158
  %v308 = vpop.f32.mrb[0].mxu0
  %v309 = vadd.f32 %v135, %v308
  %v310 = vpop.f32.mrb[0].mxu0
  %v311 = vpop.f32.mrb[0].mxu0
  %v312 = vadd.f32 %v135, %v311
  %v313 = vpop.f32.mrb[0].mxu0
  %314 = vmatprep.mubr.bf16.mxu0 0
  %315 = vmatmul.mubr.bf16.gmra.mrb[0].mxu0 %v161
  %v316 = vpop.f32.mrb[0].mxu0
  %v317 = vadd.f32 %v135, %v316
  %v318 = vpop.f32.mrb[0].mxu0
  %v319 = vpop.f32.mrb[0].mxu0
  %v320 = vadd.f32 %v135, %v319
  %v321 = vpop.f32.mrb[0].mxu0
  %322 = vmatprep.mubr.bf16.mxu0 0
  %323 = vmatmul.mubr.bf16.gmra.mrb[0].mxu0 %v164
  %v324 = vpop.f32.mrb[0].mxu0
  %v325 = vadd.f32 %v135, %v324
  %v326 = vpop.f32.mrb[0].mxu0
  %v327 = vpop.f32.mrb[0].mxu0
  %v328 = vadd.f32 %v135, %v327
  %v329 = vpop.f32.mrb[0].mxu0
  %330 = vmatprep.mubr.bf16.mxu0 0
  %331 = vmatmul.mubr.bf16.gmra.mrb[0].mxu0 %v167
  %v332 = vpop.f32.mrb[0].mxu0
  %v333 = vadd.f32 %v135, %v332
  %v334 = vpop.f32.mrb[0].mxu0
  %v335 = vpop.f32.mrb[0].mxu0
  %v336 = vadd.f32 %v135, %v335
  %v337 = vpop.f32.mrb[0].mxu0
  %338 = vmatprep.mubr.bf16.mxu0 0
  %339 = vmatmul.mubr.bf16.gmra.mrb[0].mxu0 %v170
  %v340 = vpop.f32.mrb[0].mxu0
  %v341 = vadd.f32 %v135, %v340
  %v342 = vpop.f32.mrb[0].mxu0
  %v343 = vpop.f32.mrb[0].mxu0
  %v344 = vadd.f32 %v135, %v343
  %v345 = vpop.f32.mrb[0].mxu0
  %346 = vmatprep.mubr.bf16.mxu0 0
  %347 = vmatmul.mubr.bf16.gmra.mrb[0].mxu0 %v173
  %v348 = vpop.f32.mrb[0].mxu0
  %v349 = vadd.f32 %v135, %v348
  %v350 = vpop.f32.mrb[0].mxu0
  %v351 = vpop.f32.mrb[0].mxu0
  %v352 = vadd.f32 %v135, %v351
  %v353 = vpop.f32.mrb[0].mxu0
  %354 = vmatprep.mubr.bf16.mxu0 0
  %355 = vmatmul.mubr.bf16.gmra.mrb[0].mxu0 %v176
  %v356 = vpop.f32.mrb[0].mxu0
  %v357 = vadd.f32 %v135, %v356
  %v358 = vpop.f32.mrb[0].mxu0
  %v359 = vpop.f32.mrb[0].mxu0
  %v360 = vadd.f32 %v135, %v359
  %v361 = vpop.f32.mrb[0].mxu0
  %362 = vmatprep.mubr.bf16.mxu0 0
  %363 = vmatmul.mubr.bf16.gmra.mrb[0].mxu0 %v179
  %v364 = vpop.f32.mrb[0].mxu0
  %v365 = vadd.f32 %v135, %v364
  %v366 = vpop.f32.mrb[0].mxu0
  %v367 = vpop.f32.mrb[0].mxu0
  %v368 = vadd.f32 %v135, %v367
  %v369 = vpop.f32.mrb[0].mxu0
  %370 = vmatprep.mubr.bf16.mxu0 0
  %371 = vmatmul.mubr.bf16.gmra.mrb[0].mxu0 %v182
  %v372 = vpop.f32.mrb[0].mxu0
  %v373 = vadd.f32 %v135, %v372
  %v374 = vpop.f32.mrb[0].mxu0
  %v375 = vpop.f32.mrb[0].mxu0
  %v376 = vadd.f32 %v135, %v375
  %v377 = vpop.f32.mrb[0].mxu0
  %378 = vmatprep.mubr.bf16.mxu0 0
  %379 = vmatmul.mubr.bf16.gmra.mrb[0].mxu0 %v185
  %v380 = vpop.f32.mrb[0].mxu0
  %v381 = vadd.f32 %v135, %v380
  %v382 = vpop.f32.mrb[0].mxu0
  %v383 = vpop.f32.mrb[0].mxu0
  %v384 = vadd.f32 %v135, %v383
  %v385 = vpop.f32.mrb[0].mxu0
  %386 = vmatprep.mubr.bf16.mxu0 0
  %387 = vmatmul.mubr.bf16.gmra.mrb[0].mxu0 %v188
  %v388 = vpop.f32.mrb[0].mxu0
  %v389 = vadd.f32 %v135, %v388
  %v390 = vpop.f32.mrb[0].mxu0
  %v391 = vpop.f32.mrb[0].mxu0
  %v392 = vadd.f32 %v135, %v391
  %v393 = vpop.f32.mrb[0].mxu0
  %394 = vmatprep.mubr.bf16.mxu0 0
  %395 = vmatmul.mubr.bf16.gmra.mrb[0].mxu0 %v191
  %v396 = vpop.f32.mrb[0].mxu0
  %v397 = vadd.f32 %v135, %v396
  %v398 = vpop.f32.mrb[0].mxu0
  %v399 = vpop.f32.mrb[0].mxu0
  %v400 = vadd.f32 %v135, %v399
  %v401 = vpop.f32.mrb[0].mxu0
  %402 = vmatprep.mubr.bf16.mxu0 0
  %403 = vmatmul.mubr.bf16.gmra.mrb[0].mxu0 %v194
  %v404 = vpop.f32.mrb[0].mxu0
  %v405 = vadd.f32 %v135, %v404
  %v406 = vpop.f32.mrb[0].mxu0
  %v407 = vpop.f32.mrb[0].mxu0
  %v408 = vadd.f32 %v135, %v407
  %v409 = vpop.f32.mrb[0].mxu0
  %410 = vmatprep.mubr.bf16.mxu0 0
  %411 = vmatmul.mubr.bf16.gmra.mrb[0].mxu0 %v197
  %v412 = vpop.f32.mrb[0].mxu0
  %v413 = vadd.f32 %v135, %v412
  %v414 = vpop.f32.mrb[0].mxu0
  %v415 = vpop.f32.mrb[0].mxu0
  %v416 = vadd.f32 %v135, %v415
  %v417 = vpop.f32.mrb[0].mxu0
  %418 = vmatprep.mubr.bf16.mxu0 0
  %419 = vmatmul.mubr.bf16.gmra.mrb[0].mxu0 %v200
  %v420 = vpop.f32.mrb[0].mxu0
  %v421 = vadd.f32 %v135, %v420
  %v422 = vpop.f32.mrb[0].mxu0
  %v423 = vpop.f32.mrb[0].mxu0
  %v424 = vadd.f32 %v135, %v423
  %v425 = vpop.f32.mrb[0].mxu0
  %426 = vmatprep.mubr.bf16.mxu0 0
  %427 = vmatmul.mubr.bf16.gmra.mrb[0].mxu0 %v203
  %v428 = vpop.f32.mrb[0].mxu0
  %v429 = vadd.f32 %v135, %v428
  %v430 = vpop.f32.mrb[0].mxu0
  %v431 = vpop.f32.mrb[0].mxu0
  %v432 = vadd.f32 %v135, %v431
  %v433 = vpop.f32.mrb[0].mxu0
  %434 = vmatprep.mubr.bf16.mxu0 0
  %435 = vmatmul.mubr.bf16.gmra.mrb[0].mxu0 %v206
  %v436 = vpop.f32.mrb[0].mxu0
  %v437 = vadd.f32 %v135, %v436
  %v438 = vpop.f32.mrb[0].mxu0
  %v439 = vpop.f32.mrb[0].mxu0
  %v440 = vadd.f32 %v135, %v439
  %v441 = vpop.f32.mrb[0].mxu0
  %442 = vmatprep.mubr.bf16.mxu0 0
  %443 = vmatmul.mubr.bf16.gmra.mrb[0].mxu0 %v209
  %v444 = vpop.f32.mrb[0].mxu0
  %v445 = vadd.f32 %v135, %v444
  %v446 = vpop.f32.mrb[0].mxu0
  %v447 = vpop.f32.mrb[0].mxu0
  %v448 = vadd.f32 %v135, %v447
  %v449 = vpop.f32.mrb[0].mxu0
  %450 = vmatprep.mubr.bf16.mxu0 0
  %451 = vmatmul.mubr.bf16.gmra.mrb[0].mxu0 %v212
  %v452 = vpop.f32.mrb[0].mxu0
  %v453 = vadd.f32 %v135, %v452
  %v454 = vpop.f32.mrb[0].mxu0
  %v455 = vpop.f32.mrb[0].mxu0
  %v456 = vadd.f32 %v135, %v455
  %v457 = vpop.f32.mrb[0].mxu0
  %458 = vmatprep.mubr.bf16.mxu0 0
  %459 = vmatmul.mubr.bf16.gmra.mrb[0].mxu0 %v215
  %v460 = vpop.f32.mrb[0].mxu0
  %v461 = vadd.f32 %v135, %v460
  %v462 = vpop.f32.mrb[0].mxu0
  %v463 = vpop.f32.mrb[0].mxu0
  %v464 = vadd.f32 %v135, %v463
  %v465 = vpop.f32.mrb[0].mxu0
  %466 = vmatprep.mubr.bf16.mxu0 0
  %467 = vmatmul.mubr.bf16.gmra.mrb[0].mxu0 %v218
  %v468 = vpop.f32.mrb[0].mxu0
  %v469 = vadd.f32 %v135, %v468
  %v470 = vpop.f32.mrb[0].mxu0
  %v471 = vpop.f32.mrb[0].mxu0
  %v472 = vadd.f32 %v135, %v471
  %v473 = vpop.f32.mrb[0].mxu0
  %474 = vmatprep.mubr.bf16.mxu0 0
  %475 = vmatmul.mubr.bf16.gmra.mrb[0].mxu0 %v221
  %v476 = vpop.f32.mrb[0].mxu0
  %v477 = vadd.f32 %v135, %v476
  %v478 = vpop.f32.mrb[0].mxu0
  %v479 = vpop.f32.mrb[0].mxu0
  %v480 = vadd.f32 %v135, %v479
  %v481 = vpop.f32.mrb[0].mxu0
  %482 = vmatprep.mubr.bf16.mxu0 0
  %483 = vmatmul.mubr.bf16.gmra.mrb[0].mxu0 %v224
  %v484 = vpop.f32.mrb[0].mxu0
  %v485 = vadd.f32 %v135, %v484
  %v486 = vpop.f32.mrb[0].mxu0
  %v487 = vpop.f32.mrb[0].mxu0
  %v488 = vadd.f32 %v135, %v487
  %v489 = vpop.f32.mrb[0].mxu0
  %490 = vmatprep.mubr.bf16.mxu0 0
  %491 = vmatmul.mubr.bf16.gmra.mrb[0].mxu0 %v227
  %v492 = vpop.f32.mrb[0].mxu0
  %v493 = vadd.f32 %v135, %v492
  %v494 = vpop.f32.mrb[0].mxu0
  %v495 = vpop.f32.mrb[0].mxu0
  %v496 = vadd.f32 %v135, %v495
  %v497 = vpop.f32.mrb[0].mxu0
  %498 = vmatprep.mubr.bf16.mxu0 0
  %499 = vmatmul.mubr.bf16.gmra.mrb[0].mxu0 %v230
  %v500 = vpop.f32.mrb[0].mxu0
  %v501 = vadd.f32 %v135, %v500
  %v502 = vpop.f32.mrb[0].mxu0
  %v503 = vpop.f32.mrb[0].mxu0
  %v504 = vadd.f32 %v135, %v503
  %v505 = vpop.f32.mrb[0].mxu0
  %506 = vmatprep.mubr.bf16.mxu0 0
  %507 = vmatmul.mubr.bf16.gmra.mrb[0].mxu0 %v233
  %v508 = vpop.f32.mrb[0].mxu0
  %v509 = vadd.f32 %v135, %v508
  %v510 = vpop.f32.mrb[0].mxu0
  %v511 = vpop.f32.mrb[0].mxu0
  %v512 = vadd.f32 %v135, %v511
  %v513 = vpop.f32.mrb[0].mxu0
  %514 = vmatprep.mubr.bf16.mxu0 0
  %515 = vmatmul.mubr.bf16.gmra.mrb[0].mxu0 %v236
  %v516 = vpop.f32.mrb[0].mxu0
  %v517 = vadd.f32 %v135, %v516
  %v518 = vpop.f32.mrb[0].mxu0
  %v519 = vpop.f32.mrb[0].mxu0
  %v520 = vadd.f32 %v135, %v519
  %v521 = vpop.f32.mrb[0].mxu0
  %522 = vmatprep.mubr.bf16.mxu0 0
  %523 = vmatmul.mubr.bf16.gmra.mrb[0].mxu0 %v239
  %v524 = vpop.f32.mrb[0].mxu0
  %v525 = vadd.f32 %v135, %v524
  %v526 = vpop.f32.mrb[0].mxu0
  %v527 = vpop.f32.mrb[0].mxu0
  %v528 = vadd.f32 %v135, %v527
  %v529 = vpop.f32.mrb[0].mxu0
  %530 = vmatprep.mubr.bf16.mxu0 0
  %531 = vmatmul.mubr.bf16.gmra.mrb[0].mxu0 %v242
  %v532 = vpop.f32.mrb[0].mxu0
  %v533 = vadd.f32 %v135, %v532
  %v534 = vpop.f32.mrb[0].mxu0
  %v535 = vpop.f32.mrb[0].mxu0
  %v536 = vadd.f32 %v135, %v535
  %v537 = vpop.f32.mrb[0].mxu0
  %538 = vdwg.mxu0
  %v539 = vpack.c.bf16 %v288, %v285
  %v540 = vpack.c.bf16 %v296, %v293
  %v541 = vpack.c.bf16 %v304, %v301
  %v542 = vpack.c.bf16 %v312, %v309
  %v543 = vpack.c.bf16 %v320, %v317
  %v544 = vpack.c.bf16 %v328, %v325
  %v545 = vpack.c.bf16 %v336, %v333
  %v546 = vpack.c.bf16 %v344, %v341
  %v547 = vpack.c.bf16 %v352, %v349
  %v548 = vpack.c.bf16 %v360, %v357
  %v549 = vpack.c.bf16 %v368, %v365
  %v550 = vpack.c.bf16 %v376, %v373
  %v551 = vpack.c.bf16 %v384, %v381
  %v552 = vpack.c.bf16 %v392, %v389
  %v553 = vpack.c.bf16 %v400, %v397
  %v554 = vpack.c.bf16 %v408, %v405
  %v555 = vpack.c.bf16 %v416, %v413
  %v556 = vpack.c.bf16 %v424, %v421
  %v557 = vpack.c.bf16 %v432, %v429
  %v558 = vpack.c.bf16 %v440, %v437
  %v559 = vpack.c.bf16 %v448, %v445
  %v560 = vpack.c.bf16 %v456, %v453
  %v561 = vpack.c.bf16 %v464, %v461
  %v562 = vpack.c.bf16 %v472, %v469
  %v563 = vpack.c.bf16 %v480, %v477
  %v564 = vpack.c.bf16 %v488, %v485
  %v565 = vpack.c.bf16 %v496, %v493
  %v566 = vpack.c.bf16 %v504, %v501
  %v567 = vpack.c.bf16 %v512, %v509
  %v568 = vpack.c.bf16 %v520, %v517
  %v569 = vpack.c.bf16 %v528, %v525
  %v570 = vpack.c.bf16 %v536, %v533
  %v603 = vunpack.c.l.b16 %v539
  %v604 = vunpack.c.h.b16 %v539
  %v605 = vunpack.c.l.b16 %v540
  %v606 = vunpack.c.h.b16 %v540
  %v607 = vunpack.c.l.b16 %v541
  %v608 = vunpack.c.h.b16 %v541
  %v609 = vunpack.c.l.b16 %v542
  %v610 = vunpack.c.h.b16 %v542
  %v611 = vunpack.c.l.b16 %v543
  %v612 = vunpack.c.h.b16 %v543
  %v613 = vunpack.c.l.b16 %v544
  %v614 = vunpack.c.h.b16 %v544
  %v615 = vunpack.c.l.b16 %v545
  %v616 = vunpack.c.h.b16 %v545
  %v617 = vunpack.c.l.b16 %v546
  %v618 = vunpack.c.h.b16 %v546
  %v619 = vunpack.c.l.b16 %v547
  %v620 = vunpack.c.h.b16 %v547
  %v621 = vunpack.c.l.b16 %v548
  %v622 = vunpack.c.h.b16 %v548
  %v623 = vunpack.c.l.b16 %v549
  %v624 = vunpack.c.h.b16 %v549
  %v625 = vunpack.c.l.b16 %v550
  %v626 = vunpack.c.h.b16 %v550
  %v627 = vunpack.c.l.b16 %v551
  %v628 = vunpack.c.h.b16 %v551
  %v629 = vunpack.c.l.b16 %v552
  %v630 = vunpack.c.h.b16 %v552
  %v631 = vunpack.c.l.b16 %v553
  %v632 = vunpack.c.h.b16 %v553
  %v633 = vunpack.c.l.b16 %v554
  %v634 = vunpack.c.h.b16 %v554
  %v635 = vunpack.c.l.b16 %v555
  %v636 = vunpack.c.h.b16 %v555
  %v637 = vunpack.c.l.b16 %v556
  %v638 = vunpack.c.h.b16 %v556
  %v639 = vunpack.c.l.b16 %v557
  %v640 = vunpack.c.h.b16 %v557
  %v641 = vunpack.c.l.b16 %v558
  %v642 = vunpack.c.h.b16 %v558
  %v643 = vunpack.c.l.b16 %v559
  %v644 = vunpack.c.h.b16 %v559
  %v645 = vunpack.c.l.b16 %v560
  %v646 = vunpack.c.h.b16 %v560
  %v647 = vunpack.c.l.b16 %v561
  %v648 = vunpack.c.h.b16 %v561
  %v649 = vunpack.c.l.b16 %v562
  %v650 = vunpack.c.h.b16 %v562
  %v651 = vunpack.c.l.b16 %v563
  %v652 = vunpack.c.h.b16 %v563
  %v653 = vunpack.c.l.b16 %v564
  %v654 = vunpack.c.h.b16 %v564
  %v655 = vunpack.c.l.b16 %v565
  %v656 = vunpack.c.h.b16 %v565
  %v657 = vunpack.c.l.b16 %v566
  %v658 = vunpack.c.h.b16 %v566
  %v659 = vunpack.c.l.b16 %v567
  %v660 = vunpack.c.h.b16 %v567
  %v661 = vunpack.c.l.b16 %v568
  %v662 = vunpack.c.h.b16 %v568
  %v663 = vunpack.c.l.b16 %v569
  %v664 = vunpack.c.h.b16 %v569
  %v665 = vunpack.c.l.b16 %v570
  %v666 = vunpack.c.h.b16 %v570
  %v667 = vpack.c.b16 %v603, %v603
  %v668 = vpack.c.b16 %v604, %v604
  %v669 = vpack.c.b16 %v605, %v605
  %v670 = vpack.c.b16 %v606, %v606
  %v671 = vpack.c.b16 %v607, %v607
  %v672 = vpack.c.b16 %v608, %v608
  %v673 = vpack.c.b16 %v609, %v609
  %v674 = vpack.c.b16 %v610, %v610
  %v675 = vpack.c.b16 %v611, %v611
  %v676 = vpack.c.b16 %v612, %v612
  %v677 = vpack.c.b16 %v613, %v613
  %v678 = vpack.c.b16 %v614, %v614
  %v679 = vpack.c.b16 %v615, %v615
  %v680 = vpack.c.b16 %v616, %v616
  %v681 = vpack.c.b16 %v617, %v617
  %v682 = vpack.c.b16 %v618, %v618
  %v683 = vpack.c.b16 %v619, %v619
  %v684 = vpack.c.b16 %v620, %v620
  %v685 = vpack.c.b16 %v621, %v621
  %v686 = vpack.c.b16 %v622, %v622
  %v687 = vpack.c.b16 %v623, %v623
  %v688 = vpack.c.b16 %v624, %v624
  %v689 = vpack.c.b16 %v625, %v625
  %v690 = vpack.c.b16 %v626, %v626
  %v691 = vpack.c.b16 %v627, %v627
  %v692 = vpack.c.b16 %v628, %v628
  %v693 = vpack.c.b16 %v629, %v629
  %v694 = vpack.c.b16 %v630, %v630
  %v695 = vpack.c.b16 %v631, %v631
  %v696 = vpack.c.b16 %v632, %v632
  %v697 = vpack.c.b16 %v633, %v633
  %v698 = vpack.c.b16 %v634, %v634
  %v699 = vpack.c.b16 %v635, %v635
  %v700 = vpack.c.b16 %v636, %v636
  %v701 = vpack.c.b16 %v637, %v637
  %v702 = vpack.c.b16 %v638, %v638
  %v703 = vpack.c.b16 %v639, %v639
  %v704 = vpack.c.b16 %v640, %v640
  %v705 = vpack.c.b16 %v641, %v641
  %v706 = vpack.c.b16 %v642, %v642
  %v707 = vpack.c.b16 %v643, %v643
  %v708 = vpack.c.b16 %v644, %v644
  %v709 = vpack.c.b16 %v645, %v645
  %v710 = vpack.c.b16 %v646, %v646
  %v711 = vpack.c.b16 %v647, %v647
  %v712 = vpack.c.b16 %v648, %v648
  %v713 = vpack.c.b16 %v649, %v649
  %v714 = vpack.c.b16 %v650, %v650
  %v715 = vpack.c.b16 %v651, %v651
  %v716 = vpack.c.b16 %v652, %v652
  %v717 = vpack.c.b16 %v653, %v653
  %v718 = vpack.c.b16 %v654, %v654
  %v719 = vpack.c.b16 %v655, %v655
  %v720 = vpack.c.b16 %v656, %v656
  %v721 = vpack.c.b16 %v657, %v657
  %v722 = vpack.c.b16 %v658, %v658
  %v723 = vpack.c.b16 %v659, %v659
  %v724 = vpack.c.b16 %v660, %v660
  %v725 = vpack.c.b16 %v661, %v661
  %v726 = vpack.c.b16 %v662, %v662
  %v727 = vpack.c.b16 %v663, %v663
  %v728 = vpack.c.b16 %v664, %v664
  %v729 = vpack.c.b16 %v665, %v665
  %v730 = vpack.c.b16 %v666, %v666
  %vm795 = vcmask 257024
  %796 = vst.msk [vmem:[%s7] sm:$0xf] %vm795, %v667
  %797 = vst.msk [vmem:[%s7 + $0x4] sm:$0xf] %vm795, %v668
  %798 = vst.msk [vmem:[%s7 + $0x8] sm:$0xf] %vm795, %v669
  %799 = vst.msk [vmem:[%s7 + $0xc] sm:$0xf] %vm795, %v670
  %800 = vst.msk [vmem:[%s7 + $0x10] sm:$0xf] %vm795, %v671
  %801 = vst.msk [vmem:[%s7 + $0x14] sm:$0xf] %vm795, %v672
  %802 = vst.msk [vmem:[%s7 + $0x18] sm:$0xf] %vm795, %v673
  %803 = vst.msk [vmem:[%s7 + $0x1c] sm:$0xf] %vm795, %v674
  %804 = vst.msk [vmem:[%s7 + $0x20] sm:$0xf] %vm795, %v675
  %805 = vst.msk [vmem:[%s7 + $0x24] sm:$0xf] %vm795, %v676
  %806 = vst.msk [vmem:[%s7 + $0x28] sm:$0xf] %vm795, %v677
  %807 = vst.msk [vmem:[%s7 + $0x2c] sm:$0xf] %vm795, %v678
  %808 = vst.msk [vmem:[%s7 + $0x30] sm:$0xf] %vm795, %v679
  %809 = vst.msk [vmem:[%s7 + $0x34] sm:$0xf] %vm795, %v680
  %810 = vst.msk [vmem:[%s7 + $0x38] sm:$0xf] %vm795, %v681
  %811 = vst.msk [vmem:[%s7 + $0x3c] sm:$0xf] %vm795, %v682
  %812 = vst.msk [vmem:[%s7 + $0x40] sm:$0xf] %vm795, %v683
  %813 = vst.msk [vmem:[%s7 + $0x44] sm:$0xf] %vm795, %v684
  %814 = vst.msk [vmem:[%s7 + $0x48] sm:$0xf] %vm795, %v685
  %815 = vst.msk [vmem:[%s7 + $0x4c] sm:$0xf] %vm795, %v686
  %816 = vst.msk [vmem:[%s7 + $0x50] sm:$0xf] %vm795, %v687
  %817 = vst.msk [vmem:[%s7 + $0x54] sm:$0xf] %vm795, %v688
  %818 = vst.msk [vmem:[%s7 + $0x58] sm:$0xf] %vm795, %v689
  %819 = vst.msk [vmem:[%s7 + $0x5c] sm:$0xf] %vm795, %v690
  %820 = vst.msk [vmem:[%s7 + $0x60] sm:$0xf] %vm795, %v691
  %821 = vst.msk [vmem:[%s7 + $0x64] sm:$0xf] %vm795, %v692
  %822 = vst.msk [vmem:[%s7 + $0x68] sm:$0xf] %vm795, %v693
  %823 = vst.msk [vmem:[%s7 + $0x6c] sm:$0xf] %vm795, %v694
  %824 = vst.msk [vmem:[%s7 + $0x70] sm:$0xf] %vm795, %v695
  %825 = vst.msk [vmem:[%s7 + $0x74] sm:$0xf] %vm795, %v696
  %826 = vst.msk [vmem:[%s7 + $0x78] sm:$0xf] %vm795, %v697
  %827 = vst.msk [vmem:[%s7 + $0x7c] sm:$0xf] %vm795, %v698
  %828 = vst.msk [vmem:[%s7 + $0x80] sm:$0xf] %vm795, %v699
  %829 = vst.msk [vmem:[%s7 + $0x84] sm:$0xf] %vm795, %v700
  %830 = vst.msk [vmem:[%s7 + $0x88] sm:$0xf] %vm795, %v701
  %831 = vst.msk [vmem:[%s7 + $0x8c] sm:$0xf] %vm795, %v702
  %832 = vst.msk [vmem:[%s7 + $0x90] sm:$0xf] %vm795, %v703
  %833 = vst.msk [vmem:[%s7 + $0x94] sm:$0xf] %vm795, %v704
  %834 = vst.msk [vmem:[%s7 + $0x98] sm:$0xf] %vm795, %v705
  %835 = vst.msk [vmem:[%s7 + $0x9c] sm:$0xf] %vm795, %v706
  %836 = vst.msk [vmem:[%s7 + $0xa0] sm:$0xf] %vm795, %v707
  %837 = vst.msk [vmem:[%s7 + $0xa4] sm:$0xf] %vm795, %v708
  %838 = vst.msk [vmem:[%s7 + $0xa8] sm:$0xf] %vm795, %v709
  %839 = vst.msk [vmem:[%s7 + $0xac] sm:$0xf] %vm795, %v710
  %840 = vst.msk [vmem:[%s7 + $0xb0] sm:$0xf] %vm795, %v711
  %841 = vst.msk [vmem:[%s7 + $0xb4] sm:$0xf] %vm795, %v712
  %842 = vst.msk [vmem:[%s7 + $0xb8] sm:$0xf] %vm795, %v713
  %843 = vst.msk [vmem:[%s7 + $0xbc] sm:$0xf] %vm795, %v714
  %844 = vst.msk [vmem:[%s7 + $0xc0] sm:$0xf] %vm795, %v715
  %845 = vst.msk [vmem:[%s7 + $0xc4] sm:$0xf] %vm795, %v716
  %846 = vst.msk [vmem:[%s7 + $0xc8] sm:$0xf] %vm795, %v717
  %847 = vst.msk [vmem:[%s7 + $0xcc] sm:$0xf] %vm795, %v718
  %848 = vst.msk [vmem:[%s7 + $0xd0] sm:$0xf] %vm795, %v719
  %849 = vst.msk [vmem:[%s7 + $0xd4] sm:$0xf] %vm795, %v720
  %850 = vst.msk [vmem:[%s7 + $0xd8] sm:$0xf] %vm795, %v721
  %851 = vst.msk [vmem:[%s7 + $0xdc] sm:$0xf] %vm795, %v722
  %852 = vst.msk [vmem:[%s7 + $0xe0] sm:$0xf] %vm795, %v723
  %853 = vst.msk [vmem:[%s7 + $0xe4] sm:$0xf] %vm795, %v724
  %854 = vst.msk [vmem:[%s7 + $0xe8] sm:$0xf] %vm795, %v725
  %855 = vst.msk [vmem:[%s7 + $0xec] sm:$0xf] %vm795, %v726
  %856 = vst.msk [vmem:[%s7 + $0xf0] sm:$0xf] %vm795, %v727
  %857 = vst.msk [vmem:[%s7 + $0xf4] sm:$0xf] %vm795, %v728
  %858 = vst.msk [vmem:[%s7 + $0xf8] sm:$0xf] %vm795, %v729
  %859 = vst.msk [vmem:[%s7 + $0xfc] sm:$0xf] %vm795, %v730
  %v860 = vld [vmem:[%s2] sm:$0xf]
  %v861 = vld [vmem:[%s2 + $0x4] sm:$0xf]
  %v862 = vld [vmem:[%s2 + $0x8] sm:$0xf]
  %v863 = vld [vmem:[%s2 + $0xc] sm:$0xf]
  %v864 = vld [vmem:[%s5] sm:$0x1]
  %v866 = vlaneseq
  %v867 = vshrl.u32 %v866, 7
  %v868 = vsub.s32 0, %v867
  %v869 = vrot.slane %v864, %v868
  %v875 = vunpack.c.l.b16 %v860
  %v876 = vunpack.c.l.b16 %v861
  %v877 = vunpack.c.l.b16 %v862
  %v878 = vunpack.c.l.b16 %v863
  %v879 = vpack.c.b16 %v876, %v875
  %v880 = vpack.c.b16 %v878, %v877
  %v882 = vsel %vm147, %v879, 0
  %v885 = vsel %vm147, %v880, 0
  %887 = vmatprep.subr.bf16.mxu0 0
  %888 = vmatpush1.bf16.xpose.msra.mxu0 %v882
  %889 = vmatprep.subr.bf16.mxu0 0
  %890 = vmatpush1.bf16.xpose.msra.mxu0 %v885
  %891 = vmatprep.subr.bf16.mxu0 0
  %892 = vmatpush1.bf16.xpose.msra.mxu0 0
  %893 = vmatprep.subr.bf16.mxu0 0
  %894 = vmatpush1.bf16.xpose.msra.mxu0 0
  %895 = vmatprep.subr.bf16.mxu0 0
  %896 = vmatpush1.bf16.xpose.msra.mxu0 0
  %897 = vmatprep.subr.bf16.mxu0 0
  %898 = vmatpush1.bf16.xpose.msra.mxu0 0
  %899 = vmatprep.subr.bf16.mxu0 0
  %900 = vmatpush1.bf16.xpose.msra.mxu0 0
  %901 = vmatprep.subr.bf16.mxu0 0
  %902 = vmatpush1.bf16.xpose.msra.mxu0 0
  %903 = vmatprep.subr.bf16.mxu0 0
  %904 = vmatpush1.bf16.xpose.msra.mxu0 0
  %905 = vmatprep.subr.bf16.mxu0 0
  %906 = vmatpush1.bf16.xpose.msra.mxu0 0
  %907 = vmatprep.subr.bf16.mxu0 0
  %908 = vmatpush1.bf16.xpose.msra.mxu0 0
  %909 = vmatprep.subr.bf16.mxu0 0
  %910 = vmatpush1.bf16.xpose.msra.mxu0 0
  %911 = vmatprep.subr.bf16.mxu0 0
  %912 = vmatpush1.bf16.xpose.msra.mxu0 0
  %913 = vmatprep.subr.bf16.mxu0 0
  %914 = vmatpush1.bf16.xpose.msra.mxu0 0
  %915 = vmatprep.subr.bf16.mxu0 0
  %916 = vmatpush1.bf16.xpose.msra.mxu0 0
  %917 = vmatprep.subr.bf16.mxu0 0
  %918 = vmatpush1.bf16.xpose.msra.mxu0 0
  %919 = vmatprep.mubr.bf16.mxu0 0
  %920 = vmatmul.mubr.bf16.gmra.mrb[0].mxu0 %v149
  %v921 = vpop.f32.mrb[0].mxu0
  %v922 = vadd.f32 %v869, %v921
  %v923 = vpop.f32.mrb[0].mxu0
  %v924 = vpop.f32.mrb[0].mxu0
  %v925 = vadd.f32 %v869, %v924
  %v926 = vpop.f32.mrb[0].mxu0
  %927 = vmatprep.mubr.bf16.mxu0 0
  %928 = vmatmul.mubr.bf16.gmra.mrb[0].mxu0 %v152
  %v929 = vpop.f32.mrb[0].mxu0
  %v930 = vadd.f32 %v869, %v929
  %v931 = vpop.f32.mrb[0].mxu0
  %v932 = vpop.f32.mrb[0].mxu0
  %v933 = vadd.f32 %v869, %v932
  %v934 = vpop.f32.mrb[0].mxu0
  %935 = vmatprep.mubr.bf16.mxu0 0
  %936 = vmatmul.mubr.bf16.gmra.mrb[0].mxu0 %v155
  %v937 = vpop.f32.mrb[0].mxu0
  %v938 = vadd.f32 %v869, %v937
  %v939 = vpop.f32.mrb[0].mxu0
  %v940 = vpop.f32.mrb[0].mxu0
  %v941 = vadd.f32 %v869, %v940
  %v942 = vpop.f32.mrb[0].mxu0
  %943 = vmatprep.mubr.bf16.mxu0 0
  %944 = vmatmul.mubr.bf16.gmra.mrb[0].mxu0 %v158
  %v945 = vpop.f32.mrb[0].mxu0
  %v946 = vadd.f32 %v869, %v945
  %v947 = vpop.f32.mrb[0].mxu0
  %v948 = vpop.f32.mrb[0].mxu0
  %v949 = vadd.f32 %v869, %v948
  %v950 = vpop.f32.mrb[0].mxu0
  %951 = vmatprep.mubr.bf16.mxu0 0
  %952 = vmatmul.mubr.bf16.gmra.mrb[0].mxu0 %v161
  %v953 = vpop.f32.mrb[0].mxu0
  %v954 = vadd.f32 %v869, %v953
  %v955 = vpop.f32.mrb[0].mxu0
  %v956 = vpop.f32.mrb[0].mxu0
  %v957 = vadd.f32 %v869, %v956
  %v958 = vpop.f32.mrb[0].mxu0
  %959 = vmatprep.mubr.bf16.mxu0 0
  %960 = vmatmul.mubr.bf16.gmra.mrb[0].mxu0 %v164
  %v961 = vpop.f32.mrb[0].mxu0
  %v962 = vadd.f32 %v869, %v961
  %v963 = vpop.f32.mrb[0].mxu0
  %v964 = vpop.f32.mrb[0].mxu0
  %v965 = vadd.f32 %v869, %v964
  %v966 = vpop.f32.mrb[0].mxu0
  %967 = vmatprep.mubr.bf16.mxu0 0
  %968 = vmatmul.mubr.bf16.gmra.mrb[0].mxu0 %v167
  %v969 = vpop.f32.mrb[0].mxu0
  %v970 = vadd.f32 %v869, %v969
  %v971 = vpop.f32.mrb[0].mxu0
  %v972 = vpop.f32.mrb[0].mxu0
  %v973 = vadd.f32 %v869, %v972
  %v974 = vpop.f32.mrb[0].mxu0
  %975 = vmatprep.mubr.bf16.mxu0 0
  %976 = vmatmul.mubr.bf16.gmra.mrb[0].mxu0 %v170
  %v977 = vpop.f32.mrb[0].mxu0
  %v978 = vadd.f32 %v869, %v977
  %v979 = vpop.f32.mrb[0].mxu0
  %v980 = vpop.f32.mrb[0].mxu0
  %v981 = vadd.f32 %v869, %v980
  %v982 = vpop.f32.mrb[0].mxu0
  %983 = vmatprep.mubr.bf16.mxu0 0
  %984 = vmatmul.mubr.bf16.gmra.mrb[0].mxu0 %v173
  %v985 = vpop.f32.mrb[0].mxu0
  %v986 = vadd.f32 %v869, %v985
  %v987 = vpop.f32.mrb[0].mxu0
  %v988 = vpop.f32.mrb[0].mxu0
  %v989 = vadd.f32 %v869, %v988
  %v990 = vpop.f32.mrb[0].mxu0
  %991 = vmatprep.mubr.bf16.mxu0 0
  %992 = vmatmul.mubr.bf16.gmra.mrb[0].mxu0 %v176
  %v993 = vpop.f32.mrb[0].mxu0
  %v994 = vadd.f32 %v869, %v993
  %v995 = vpop.f32.mrb[0].mxu0
  %v996 = vpop.f32.mrb[0].mxu0
  %v997 = vadd.f32 %v869, %v996
  %v998 = vpop.f32.mrb[0].mxu0
  %999 = vmatprep.mubr.bf16.mxu0 0
  %1000 = vmatmul.mubr.bf16.gmra.mrb[0].mxu0 %v179
  %v1001 = vpop.f32.mrb[0].mxu0
  %v1002 = vadd.f32 %v869, %v1001
  %v1003 = vpop.f32.mrb[0].mxu0
  %v1004 = vpop.f32.mrb[0].mxu0
  %v1005 = vadd.f32 %v869, %v1004
  %v1006 = vpop.f32.mrb[0].mxu0
  %1007 = vmatprep.mubr.bf16.mxu0 0
  %1008 = vmatmul.mubr.bf16.gmra.mrb[0].mxu0 %v182
  %v1009 = vpop.f32.mrb[0].mxu0
  %v1010 = vadd.f32 %v869, %v1009
  %v1011 = vpop.f32.mrb[0].mxu0
  %v1012 = vpop.f32.mrb[0].mxu0
  %v1013 = vadd.f32 %v869, %v1012
  %v1014 = vpop.f32.mrb[0].mxu0
  %1015 = vmatprep.mubr.bf16.mxu0 0
  %1016 = vmatmul.mubr.bf16.gmra.mrb[0].mxu0 %v185
  %v1017 = vpop.f32.mrb[0].mxu0
  %v1018 = vadd.f32 %v869, %v1017
  %v1019 = vpop.f32.mrb[0].mxu0
  %v1020 = vpop.f32.mrb[0].mxu0
  %v1021 = vadd.f32 %v869, %v1020
  %v1022 = vpop.f32.mrb[0].mxu0
  %1023 = vmatprep.mubr.bf16.mxu0 0
  %1024 = vmatmul.mubr.bf16.gmra.mrb[0].mxu0 %v188
  %v1025 = vpop.f32.mrb[0].mxu0
  %v1026 = vadd.f32 %v869, %v1025
  %v1027 = vpop.f32.mrb[0].mxu0
  %v1028 = vpop.f32.mrb[0].mxu0
  %v1029 = vadd.f32 %v869, %v1028
  %v1030 = vpop.f32.mrb[0].mxu0
  %1031 = vmatprep.mubr.bf16.mxu0 0
  %1032 = vmatmul.mubr.bf16.gmra.mrb[0].mxu0 %v191
  %v1033 = vpop.f32.mrb[0].mxu0
  %v1034 = vadd.f32 %v869, %v1033
  %v1035 = vpop.f32.mrb[0].mxu0
  %v1036 = vpop.f32.mrb[0].mxu0
  %v1037 = vadd.f32 %v869, %v1036
  %v1038 = vpop.f32.mrb[0].mxu0
  %1039 = vmatprep.mubr.bf16.mxu0 0
  %1040 = vmatmul.mubr.bf16.gmra.mrb[0].mxu0 %v194
  %v1041 = vpop.f32.mrb[0].mxu0
  %v1042 = vadd.f32 %v869, %v1041
  %v1043 = vpop.f32.mrb[0].mxu0
  %v1044 = vpop.f32.mrb[0].mxu0
  %v1045 = vadd.f32 %v869, %v1044
  %v1046 = vpop.f32.mrb[0].mxu0
  %1047 = vmatprep.mubr.bf16.mxu0 0
  %1048 = vmatmul.mubr.bf16.gmra.mrb[0].mxu0 %v197
  %v1049 = vpop.f32.mrb[0].mxu0
  %v1050 = vadd.f32 %v869, %v1049
  %v1051 = vpop.f32.mrb[0].mxu0
  %v1052 = vpop.f32.mrb[0].mxu0
  %v1053 = vadd.f32 %v869, %v1052
  %v1054 = vpop.f32.mrb[0].mxu0
  %1055 = vmatprep.mubr.bf16.mxu0 0
  %1056 = vmatmul.mubr.bf16.gmra.mrb[0].mxu0 %v200
  %v1057 = vpop.f32.mrb[0].mxu0
  %v1058 = vadd.f32 %v869, %v1057
  %v1059 = vpop.f32.mrb[0].mxu0
  %v1060 = vpop.f32.mrb[0].mxu0
  %v1061 = vadd.f32 %v869, %v1060
  %v1062 = vpop.f32.mrb[0].mxu0
  %1063 = vmatprep.mubr.bf16.mxu0 0
  %1064 = vmatmul.mubr.bf16.gmra.mrb[0].mxu0 %v203
  %v1065 = vpop.f32.mrb[0].mxu0
  %v1066 = vadd.f32 %v869, %v1065
  %v1067 = vpop.f32.mrb[0].mxu0
  %v1068 = vpop.f32.mrb[0].mxu0
  %v1069 = vadd.f32 %v869, %v1068
  %v1070 = vpop.f32.mrb[0].mxu0
  %1071 = vmatprep.mubr.bf16.mxu0 0
  %1072 = vmatmul.mubr.bf16.gmra.mrb[0].mxu0 %v206
  %v1073 = vpop.f32.mrb[0].mxu0
  %v1074 = vadd.f32 %v869, %v1073
  %v1075 = vpop.f32.mrb[0].mxu0
  %v1076 = vpop.f32.mrb[0].mxu0
  %v1077 = vadd.f32 %v869, %v1076
  %v1078 = vpop.f32.mrb[0].mxu0
  %1079 = vmatprep.mubr.bf16.mxu0 0
  %1080 = vmatmul.mubr.bf16.gmra.mrb[0].mxu0 %v209
  %v1081 = vpop.f32.mrb[0].mxu0
  %v1082 = vadd.f32 %v869, %v1081
  %v1083 = vpop.f32.mrb[0].mxu0
  %v1084 = vpop.f32.mrb[0].mxu0
  %v1085 = vadd.f32 %v869, %v1084
  %v1086 = vpop.f32.mrb[0].mxu0
  %1087 = vmatprep.mubr.bf16.mxu0 0
  %1088 = vmatmul.mubr.bf16.gmra.mrb[0].mxu0 %v212
  %v1089 = vpop.f32.mrb[0].mxu0
  %v1090 = vadd.f32 %v869, %v1089
  %v1091 = vpop.f32.mrb[0].mxu0
  %v1092 = vpop.f32.mrb[0].mxu0
  %v1093 = vadd.f32 %v869, %v1092
  %v1094 = vpop.f32.mrb[0].mxu0
  %1095 = vmatprep.mubr.bf16.mxu0 0
  %1096 = vmatmul.mubr.bf16.gmra.mrb[0].mxu0 %v215
  %v1097 = vpop.f32.mrb[0].mxu0
  %v1098 = vadd.f32 %v869, %v1097
  %v1099 = vpop.f32.mrb[0].mxu0
  %v1100 = vpop.f32.mrb[0].mxu0
  %v1101 = vadd.f32 %v869, %v1100
  %v1102 = vpop.f32.mrb[0].mxu0
  %1103 = vmatprep.mubr.bf16.mxu0 0
  %1104 = vmatmul.mubr.bf16.gmra.mrb[0].mxu0 %v218
  %v1105 = vpop.f32.mrb[0].mxu0
  %v1106 = vadd.f32 %v869, %v1105
  %v1107 = vpop.f32.mrb[0].mxu0
  %v1108 = vpop.f32.mrb[0].mxu0
  %v1109 = vadd.f32 %v869, %v1108
  %v1110 = vpop.f32.mrb[0].mxu0
  %1111 = vmatprep.mubr.bf16.mxu0 0
  %1112 = vmatmul.mubr.bf16.gmra.mrb[0].mxu0 %v221
  %v1113 = vpop.f32.mrb[0].mxu0
  %v1114 = vadd.f32 %v869, %v1113
  %v1115 = vpop.f32.mrb[0].mxu0
  %v1116 = vpop.f32.mrb[0].mxu0
  %v1117 = vadd.f32 %v869, %v1116
  %v1118 = vpop.f32.mrb[0].mxu0
  %1119 = vmatprep.mubr.bf16.mxu0 0
  %1120 = vmatmul.mubr.bf16.gmra.mrb[0].mxu0 %v224
  %v1121 = vpop.f32.mrb[0].mxu0
  %v1122 = vadd.f32 %v869, %v1121
  %v1123 = vpop.f32.mrb[0].mxu0
  %v1124 = vpop.f32.mrb[0].mxu0
  %v1125 = vadd.f32 %v869, %v1124
  %v1126 = vpop.f32.mrb[0].mxu0
  %1127 = vmatprep.mubr.bf16.mxu0 0
  %1128 = vmatmul.mubr.bf16.gmra.mrb[0].mxu0 %v227
  %v1129 = vpop.f32.mrb[0].mxu0
  %v1130 = vadd.f32 %v869, %v1129
  %v1131 = vpop.f32.mrb[0].mxu0
  %v1132 = vpop.f32.mrb[0].mxu0
  %v1133 = vadd.f32 %v869, %v1132
  %v1134 = vpop.f32.mrb[0].mxu0
  %1135 = vmatprep.mubr.bf16.mxu0 0
  %1136 = vmatmul.mubr.bf16.gmra.mrb[0].mxu0 %v230
  %v1137 = vpop.f32.mrb[0].mxu0
  %v1138 = vadd.f32 %v869, %v1137
  %v1139 = vpop.f32.mrb[0].mxu0
  %v1140 = vpop.f32.mrb[0].mxu0
  %v1141 = vadd.f32 %v869, %v1140
  %v1142 = vpop.f32.mrb[0].mxu0
  %1143 = vmatprep.mubr.bf16.mxu0 0
  %1144 = vmatmul.mubr.bf16.gmra.mrb[0].mxu0 %v233
  %v1145 = vpop.f32.mrb[0].mxu0
  %v1146 = vadd.f32 %v869, %v1145
  %v1147 = vpop.f32.mrb[0].mxu0
  %v1148 = vpop.f32.mrb[0].mxu0
  %v1149 = vadd.f32 %v869, %v1148
  %v1150 = vpop.f32.mrb[0].mxu0
  %1151 = vmatprep.mubr.bf16.mxu0 0
  %1152 = vmatmul.mubr.bf16.gmra.mrb[0].mxu0 %v236
  %v1153 = vpop.f32.mrb[0].mxu0
  %v1154 = vadd.f32 %v869, %v1153
  %v1155 = vpop.f32.mrb[0].mxu0
  %v1156 = vpop.f32.mrb[0].mxu0
  %v1157 = vadd.f32 %v869, %v1156
  %v1158 = vpop.f32.mrb[0].mxu0
  %1159 = vmatprep.mubr.bf16.mxu0 0
  %1160 = vmatmul.mubr.bf16.gmra.mrb[0].mxu0 %v239
  %v1161 = vpop.f32.mrb[0].mxu0
  %v1162 = vadd.f32 %v869, %v1161
  %v1163 = vpop.f32.mrb[0].mxu0
  %v1164 = vpop.f32.mrb[0].mxu0
  %v1165 = vadd.f32 %v869, %v1164
  %v1166 = vpop.f32.mrb[0].mxu0
  %1167 = vmatprep.mubr.bf16.mxu0 0
  %1168 = vmatmul.mubr.bf16.gmra.mrb[0].mxu0 %v242
  %v1169 = vpop.f32.mrb[0].mxu0
  %v1170 = vadd.f32 %v869, %v1169
  %v1171 = vpop.f32.mrb[0].mxu0
  %v1172 = vpop.f32.mrb[0].mxu0
  %v1173 = vadd.f32 %v869, %v1172
  %v1174 = vpop.f32.mrb[0].mxu0
  %1175 = vdwg.mxu0
  %v1176 = vpack.c.bf16 %v925, %v922
  %v1177 = vpack.c.bf16 %v933, %v930
  %v1178 = vpack.c.bf16 %v941, %v938
  %v1179 = vpack.c.bf16 %v949, %v946
  %v1180 = vpack.c.bf16 %v957, %v954
  %v1181 = vpack.c.bf16 %v965, %v962
  %v1182 = vpack.c.bf16 %v973, %v970
  %v1183 = vpack.c.bf16 %v981, %v978
  %v1184 = vpack.c.bf16 %v989, %v986
  %v1185 = vpack.c.bf16 %v997, %v994
  %v1186 = vpack.c.bf16 %v1005, %v1002
  %v1187 = vpack.c.bf16 %v1013, %v1010
  %v1188 = vpack.c.bf16 %v1021, %v1018
  %v1189 = vpack.c.bf16 %v1029, %v1026
  %v1190 = vpack.c.bf16 %v1037, %v1034
  %v1191 = vpack.c.bf16 %v1045, %v1042
  %v1192 = vpack.c.bf16 %v1053, %v1050
  %v1193 = vpack.c.bf16 %v1061, %v1058
  %v1194 = vpack.c.bf16 %v1069, %v1066
  %v1195 = vpack.c.bf16 %v1077, %v1074
  %v1196 = vpack.c.bf16 %v1085, %v1082
  %v1197 = vpack.c.bf16 %v1093, %v1090
  %v1198 = vpack.c.bf16 %v1101, %v1098
  %v1199 = vpack.c.bf16 %v1109, %v1106
  %v1200 = vpack.c.bf16 %v1117, %v1114
  %v1201 = vpack.c.bf16 %v1125, %v1122
  %v1202 = vpack.c.bf16 %v1133, %v1130
  %v1203 = vpack.c.bf16 %v1141, %v1138
  %v1204 = vpack.c.bf16 %v1149, %v1146
  %v1205 = vpack.c.bf16 %v1157, %v1154
  %v1206 = vpack.c.bf16 %v1165, %v1162
  %v1207 = vpack.c.bf16 %v1173, %v1170
  %v1240 = vunpack.c.l.b16 %v1176
  %v1241 = vunpack.c.h.b16 %v1176
  %v1242 = vunpack.c.l.b16 %v1177
  %v1243 = vunpack.c.h.b16 %v1177
  %v1244 = vunpack.c.l.b16 %v1178
  %v1245 = vunpack.c.h.b16 %v1178
  %v1246 = vunpack.c.l.b16 %v1179
  %v1247 = vunpack.c.h.b16 %v1179
  %v1248 = vunpack.c.l.b16 %v1180
  %v1249 = vunpack.c.h.b16 %v1180
  %v1250 = vunpack.c.l.b16 %v1181
  %v1251 = vunpack.c.h.b16 %v1181
  %v1252 = vunpack.c.l.b16 %v1182
  %v1253 = vunpack.c.h.b16 %v1182
  %v1254 = vunpack.c.l.b16 %v1183
  %v1255 = vunpack.c.h.b16 %v1183
  %v1256 = vunpack.c.l.b16 %v1184
  %v1257 = vunpack.c.h.b16 %v1184
  %v1258 = vunpack.c.l.b16 %v1185
  %v1259 = vunpack.c.h.b16 %v1185
  %v1260 = vunpack.c.l.b16 %v1186
  %v1261 = vunpack.c.h.b16 %v1186
  %v1262 = vunpack.c.l.b16 %v1187
  %v1263 = vunpack.c.h.b16 %v1187
  %v1264 = vunpack.c.l.b16 %v1188
  %v1265 = vunpack.c.h.b16 %v1188
  %v1266 = vunpack.c.l.b16 %v1189
  %v1267 = vunpack.c.h.b16 %v1189
  %v1268 = vunpack.c.l.b16 %v1190
  %v1269 = vunpack.c.h.b16 %v1190
  %v1270 = vunpack.c.l.b16 %v1191
  %v1271 = vunpack.c.h.b16 %v1191
  %v1272 = vunpack.c.l.b16 %v1192
  %v1273 = vunpack.c.h.b16 %v1192
  %v1274 = vunpack.c.l.b16 %v1193
  %v1275 = vunpack.c.h.b16 %v1193
  %v1276 = vunpack.c.l.b16 %v1194
  %v1277 = vunpack.c.h.b16 %v1194
  %v1278 = vunpack.c.l.b16 %v1195
  %v1279 = vunpack.c.h.b16 %v1195
  %v1280 = vunpack.c.l.b16 %v1196
  %v1281 = vunpack.c.h.b16 %v1196
  %v1282 = vunpack.c.l.b16 %v1197
  %v1283 = vunpack.c.h.b16 %v1197
  %v1284 = vunpack.c.l.b16 %v1198
  %v1285 = vunpack.c.h.b16 %v1198
  %v1286 = vunpack.c.l.b16 %v1199
  %v1287 = vunpack.c.h.b16 %v1199
  %v1288 = vunpack.c.l.b16 %v1200
  %v1289 = vunpack.c.h.b16 %v1200
  %v1290 = vunpack.c.l.b16 %v1201
  %v1291 = vunpack.c.h.b16 %v1201
  %v1292 = vunpack.c.l.b16 %v1202
  %v1293 = vunpack.c.h.b16 %v1202
  %v1294 = vunpack.c.l.b16 %v1203
  %v1295 = vunpack.c.h.b16 %v1203
  %v1296 = vunpack.c.l.b16 %v1204
  %v1297 = vunpack.c.h.b16 %v1204
  %v1298 = vunpack.c.l.b16 %v1205
  %v1299 = vunpack.c.h.b16 %v1205
  %v1300 = vunpack.c.l.b16 %v1206
  %v1301 = vunpack.c.h.b16 %v1206
  %v1302 = vunpack.c.l.b16 %v1207
  %v1303 = vunpack.c.h.b16 %v1207
  %v1304 = vpack.c.b16 %v1240, %v1240
  %v1305 = vpack.c.b16 %v1241, %v1241
  %v1306 = vpack.c.b16 %v1242, %v1242
  %v1307 = vpack.c.b16 %v1243, %v1243
  %v1308 = vpack.c.b16 %v1244, %v1244
  %v1309 = vpack.c.b16 %v1245, %v1245
  %v1310 = vpack.c.b16 %v1246, %v1246
  %v1311 = vpack.c.b16 %v1247, %v1247
  %v1312 = vpack.c.b16 %v1248, %v1248
  %v1313 = vpack.c.b16 %v1249, %v1249
  %v1314 = vpack.c.b16 %v1250, %v1250
  %v1315 = vpack.c.b16 %v1251, %v1251
  %v1316 = vpack.c.b16 %v1252, %v1252
  %v1317 = vpack.c.b16 %v1253, %v1253
  %v1318 = vpack.c.b16 %v1254, %v1254
  %v1319 = vpack.c.b16 %v1255, %v1255
  %v1320 = vpack.c.b16 %v1256, %v1256
  %v1321 = vpack.c.b16 %v1257, %v1257
  %v1322 = vpack.c.b16 %v1258, %v1258
  %v1323 = vpack.c.b16 %v1259, %v1259
  %v1324 = vpack.c.b16 %v1260, %v1260
  %v1325 = vpack.c.b16 %v1261, %v1261
  %v1326 = vpack.c.b16 %v1262, %v1262
  %v1327 = vpack.c.b16 %v1263, %v1263
  %v1328 = vpack.c.b16 %v1264, %v1264
  %v1329 = vpack.c.b16 %v1265, %v1265
  %v1330 = vpack.c.b16 %v1266, %v1266
  %v1331 = vpack.c.b16 %v1267, %v1267
  %v1332 = vpack.c.b16 %v1268, %v1268
  %v1333 = vpack.c.b16 %v1269, %v1269
  %v1334 = vpack.c.b16 %v1270, %v1270
  %v1335 = vpack.c.b16 %v1271, %v1271
  %v1336 = vpack.c.b16 %v1272, %v1272
  %v1337 = vpack.c.b16 %v1273, %v1273
  %v1338 = vpack.c.b16 %v1274, %v1274
  %v1339 = vpack.c.b16 %v1275, %v1275
  %v1340 = vpack.c.b16 %v1276, %v1276
  %v1341 = vpack.c.b16 %v1277, %v1277
  %v1342 = vpack.c.b16 %v1278, %v1278
  %v1343 = vpack.c.b16 %v1279, %v1279
  %v1344 = vpack.c.b16 %v1280, %v1280
  %v1345 = vpack.c.b16 %v1281, %v1281
  %v1346 = vpack.c.b16 %v1282, %v1282
  %v1347 = vpack.c.b16 %v1283, %v1283
  %v1348 = vpack.c.b16 %v1284, %v1284
  %v1349 = vpack.c.b16 %v1285, %v1285
  %v1350 = vpack.c.b16 %v1286, %v1286
  %v1351 = vpack.c.b16 %v1287, %v1287
  %v1352 = vpack.c.b16 %v1288, %v1288
  %v1353 = vpack.c.b16 %v1289, %v1289
  %v1354 = vpack.c.b16 %v1290, %v1290
  %v1355 = vpack.c.b16 %v1291, %v1291
  %v1356 = vpack.c.b16 %v1292, %v1292
  %v1357 = vpack.c.b16 %v1293, %v1293
  %v1358 = vpack.c.b16 %v1294, %v1294
  %v1359 = vpack.c.b16 %v1295, %v1295
  %v1360 = vpack.c.b16 %v1296, %v1296
  %v1361 = vpack.c.b16 %v1297, %v1297
  %v1362 = vpack.c.b16 %v1298, %v1298
  %v1363 = vpack.c.b16 %v1299, %v1299
  %v1364 = vpack.c.b16 %v1300, %v1300
  %v1365 = vpack.c.b16 %v1301, %v1301
  %v1366 = vpack.c.b16 %v1302, %v1302
  %v1367 = vpack.c.b16 %v1303, %v1303
  %1432 = vst.msk [vmem:[%s8] sm:$0xf] %vm795, %v1304
  %1433 = vst.msk [vmem:[%s8 + $0x4] sm:$0xf] %vm795, %v1305
  %1434 = vst.msk [vmem:[%s8 + $0x8] sm:$0xf] %vm795, %v1306
  %1435 = vst.msk [vmem:[%s8 + $0xc] sm:$0xf] %vm795, %v1307
  %1436 = vst.msk [vmem:[%s8 + $0x10] sm:$0xf] %vm795, %v1308
  %1437 = vst.msk [vmem:[%s8 + $0x14] sm:$0xf] %vm795, %v1309
  %1438 = vst.msk [vmem:[%s8 + $0x18] sm:$0xf] %vm795, %v1310
  %1439 = vst.msk [vmem:[%s8 + $0x1c] sm:$0xf] %vm795, %v1311
  %1440 = vst.msk [vmem:[%s8 + $0x20] sm:$0xf] %vm795, %v1312
  %1441 = vst.msk [vmem:[%s8 + $0x24] sm:$0xf] %vm795, %v1313
  %1442 = vst.msk [vmem:[%s8 + $0x28] sm:$0xf] %vm795, %v1314
  %1443 = vst.msk [vmem:[%s8 + $0x2c] sm:$0xf] %vm795, %v1315
  %1444 = vst.msk [vmem:[%s8 + $0x30] sm:$0xf] %vm795, %v1316
  %1445 = vst.msk [vmem:[%s8 + $0x34] sm:$0xf] %vm795, %v1317
  %1446 = vst.msk [vmem:[%s8 + $0x38] sm:$0xf] %vm795, %v1318
  %1447 = vst.msk [vmem:[%s8 + $0x3c] sm:$0xf] %vm795, %v1319
  %1448 = vst.msk [vmem:[%s8 + $0x40] sm:$0xf] %vm795, %v1320
  %1449 = vst.msk [vmem:[%s8 + $0x44] sm:$0xf] %vm795, %v1321
  %1450 = vst.msk [vmem:[%s8 + $0x48] sm:$0xf] %vm795, %v1322
  %1451 = vst.msk [vmem:[%s8 + $0x4c] sm:$0xf] %vm795, %v1323
  %1452 = vst.msk [vmem:[%s8 + $0x50] sm:$0xf] %vm795, %v1324
  %1453 = vst.msk [vmem:[%s8 + $0x54] sm:$0xf] %vm795, %v1325
  %1454 = vst.msk [vmem:[%s8 + $0x58] sm:$0xf] %vm795, %v1326
  %1455 = vst.msk [vmem:[%s8 + $0x5c] sm:$0xf] %vm795, %v1327
  %1456 = vst.msk [vmem:[%s8 + $0x60] sm:$0xf] %vm795, %v1328
  %1457 = vst.msk [vmem:[%s8 + $0x64] sm:$0xf] %vm795, %v1329
  %1458 = vst.msk [vmem:[%s8 + $0x68] sm:$0xf] %vm795, %v1330
  %1459 = vst.msk [vmem:[%s8 + $0x6c] sm:$0xf] %vm795, %v1331
  %1460 = vst.msk [vmem:[%s8 + $0x70] sm:$0xf] %vm795, %v1332
  %1461 = vst.msk [vmem:[%s8 + $0x74] sm:$0xf] %vm795, %v1333
  %1462 = vst.msk [vmem:[%s8 + $0x78] sm:$0xf] %vm795, %v1334
  %1463 = vst.msk [vmem:[%s8 + $0x7c] sm:$0xf] %vm795, %v1335
  %1464 = vst.msk [vmem:[%s8 + $0x80] sm:$0xf] %vm795, %v1336
  %1465 = vst.msk [vmem:[%s8 + $0x84] sm:$0xf] %vm795, %v1337
  %1466 = vst.msk [vmem:[%s8 + $0x88] sm:$0xf] %vm795, %v1338
  %1467 = vst.msk [vmem:[%s8 + $0x8c] sm:$0xf] %vm795, %v1339
  %1468 = vst.msk [vmem:[%s8 + $0x90] sm:$0xf] %vm795, %v1340
  %1469 = vst.msk [vmem:[%s8 + $0x94] sm:$0xf] %vm795, %v1341
  %1470 = vst.msk [vmem:[%s8 + $0x98] sm:$0xf] %vm795, %v1342
  %1471 = vst.msk [vmem:[%s8 + $0x9c] sm:$0xf] %vm795, %v1343
  %1472 = vst.msk [vmem:[%s8 + $0xa0] sm:$0xf] %vm795, %v1344
  %1473 = vst.msk [vmem:[%s8 + $0xa4] sm:$0xf] %vm795, %v1345
  %1474 = vst.msk [vmem:[%s8 + $0xa8] sm:$0xf] %vm795, %v1346
  %1475 = vst.msk [vmem:[%s8 + $0xac] sm:$0xf] %vm795, %v1347
  %1476 = vst.msk [vmem:[%s8 + $0xb0] sm:$0xf] %vm795, %v1348
  %1477 = vst.msk [vmem:[%s8 + $0xb4] sm:$0xf] %vm795, %v1349
  %1478 = vst.msk [vmem:[%s8 + $0xb8] sm:$0xf] %vm795, %v1350
  %1479 = vst.msk [vmem:[%s8 + $0xbc] sm:$0xf] %vm795, %v1351
  %1480 = vst.msk [vmem:[%s8 + $0xc0] sm:$0xf] %vm795, %v1352
  %1481 = vst.msk [vmem:[%s8 + $0xc4] sm:$0xf] %vm795, %v1353
  %1482 = vst.msk [vmem:[%s8 + $0xc8] sm:$0xf] %vm795, %v1354
  %1483 = vst.msk [vmem:[%s8 + $0xcc] sm:$0xf] %vm795, %v1355
  %1484 = vst.msk [vmem:[%s8 + $0xd0] sm:$0xf] %vm795, %v1356
  %1485 = vst.msk [vmem:[%s8 + $0xd4] sm:$0xf] %vm795, %v1357
  %1486 = vst.msk [vmem:[%s8 + $0xd8] sm:$0xf] %vm795, %v1358
  %1487 = vst.msk [vmem:[%s8 + $0xdc] sm:$0xf] %vm795, %v1359
  %1488 = vst.msk [vmem:[%s8 + $0xe0] sm:$0xf] %vm795, %v1360
  %1489 = vst.msk [vmem:[%s8 + $0xe4] sm:$0xf] %vm795, %v1361
  %1490 = vst.msk [vmem:[%s8 + $0xe8] sm:$0xf] %vm795, %v1362
  %1491 = vst.msk [vmem:[%s8 + $0xec] sm:$0xf] %vm795, %v1363
  %1492 = vst.msk [vmem:[%s8 + $0xf0] sm:$0xf] %vm795, %v1364
  %1493 = vst.msk [vmem:[%s8 + $0xf4] sm:$0xf] %vm795, %v1365
  %1494 = vst.msk [vmem:[%s8 + $0xf8] sm:$0xf] %vm795, %v1366
  %1495 = vst.msk [vmem:[%s8 + $0xfc] sm:$0xf] %vm795, %v1367
  %v1496 = vld [vmem:[%s3] sm:$0xf]
  %v1497 = vld [vmem:[%s3 + $0x4] sm:$0xf]
  %v1498 = vld [vmem:[%s3 + $0x8] sm:$0xf]
  %v1499 = vld [vmem:[%s3 + $0xc] sm:$0xf]
  %v1500 = vld [vmem:[%s6] sm:$0x1]
  %v1502 = vlaneseq
  %v1503 = vshrl.u32 %v1502, 7
  %v1504 = vsub.s32 0, %v1503
  %v1505 = vrot.slane %v1500, %v1504
  %v1511 = vunpack.c.l.b16 %v1496
  %v1512 = vunpack.c.l.b16 %v1497
  %v1513 = vunpack.c.l.b16 %v1498
  %v1514 = vunpack.c.l.b16 %v1499
  %v1515 = vpack.c.b16 %v1512, %v1511
  %v1516 = vpack.c.b16 %v1514, %v1513
  %v1518 = vsel %vm147, %v1515, 0
  %v1521 = vsel %vm147, %v1516, 0
  %1523 = vmatprep.subr.bf16.mxu0 0
  %1524 = vmatpush1.bf16.xpose.msra.mxu0 %v1518
  %1525 = vmatprep.subr.bf16.mxu0 0
  %1526 = vmatpush1.bf16.xpose.msra.mxu0 %v1521
  %1527 = vmatprep.subr.bf16.mxu0 0
  %1528 = vmatpush1.bf16.xpose.msra.mxu0 0
  %1529 = vmatprep.subr.bf16.mxu0 0
  %1530 = vmatpush1.bf16.xpose.msra.mxu0 0
  %1531 = vmatprep.subr.bf16.mxu0 0
  %1532 = vmatpush1.bf16.xpose.msra.mxu0 0
  %1533 = vmatprep.subr.bf16.mxu0 0
  %1534 = vmatpush1.bf16.xpose.msra.mxu0 0
  %1535 = vmatprep.subr.bf16.mxu0 0
  %1536 = vmatpush1.bf16.xpose.msra.mxu0 0
  %1537 = vmatprep.subr.bf16.mxu0 0
  %1538 = vmatpush1.bf16.xpose.msra.mxu0 0
  %1539 = vmatprep.subr.bf16.mxu0 0
  %1540 = vmatpush1.bf16.xpose.msra.mxu0 0
  %1541 = vmatprep.subr.bf16.mxu0 0
  %1542 = vmatpush1.bf16.xpose.msra.mxu0 0
  %1543 = vmatprep.subr.bf16.mxu0 0
  %1544 = vmatpush1.bf16.xpose.msra.mxu0 0
  %1545 = vmatprep.subr.bf16.mxu0 0
  %1546 = vmatpush1.bf16.xpose.msra.mxu0 0
  %1547 = vmatprep.subr.bf16.mxu0 0
  %1548 = vmatpush1.bf16.xpose.msra.mxu0 0
  %1549 = vmatprep.subr.bf16.mxu0 0
  %1550 = vmatpush1.bf16.xpose.msra.mxu0 0
  %1551 = vmatprep.subr.bf16.mxu0 0
  %1552 = vmatpush1.bf16.xpose.msra.mxu0 0
  %1553 = vmatprep.subr.bf16.mxu0 0
  %1554 = vmatpush1.bf16.xpose.msra.mxu0 0
  %1555 = vmatprep.mubr.bf16.mxu0 0
  %1556 = vmatmul.mubr.bf16.gmra.mrb[0].mxu0 %v149
  %v1557 = vpop.f32.mrb[0].mxu0
  %v1558 = vadd.f32 %v1505, %v1557
  %v1559 = vpop.f32.mrb[0].mxu0
  %v1560 = vpop.f32.mrb[0].mxu0
  %v1561 = vadd.f32 %v1505, %v1560
  %v1562 = vpop.f32.mrb[0].mxu0
  %1563 = vmatprep.mubr.bf16.mxu0 0
  %1564 = vmatmul.mubr.bf16.gmra.mrb[0].mxu0 %v152
  %v1565 = vpop.f32.mrb[0].mxu0
  %v1566 = vadd.f32 %v1505, %v1565
  %v1567 = vpop.f32.mrb[0].mxu0
  %v1568 = vpop.f32.mrb[0].mxu0
  %v1569 = vadd.f32 %v1505, %v1568
  %v1570 = vpop.f32.mrb[0].mxu0
  %1571 = vmatprep.mubr.bf16.mxu0 0
  %1572 = vmatmul.mubr.bf16.gmra.mrb[0].mxu0 %v155
  %v1573 = vpop.f32.mrb[0].mxu0
  %v1574 = vadd.f32 %v1505, %v1573
  %v1575 = vpop.f32.mrb[0].mxu0
  %v1576 = vpop.f32.mrb[0].mxu0
  %v1577 = vadd.f32 %v1505, %v1576
  %v1578 = vpop.f32.mrb[0].mxu0
  %1579 = vmatprep.mubr.bf16.mxu0 0
  %1580 = vmatmul.mubr.bf16.gmra.mrb[0].mxu0 %v158
  %v1581 = vpop.f32.mrb[0].mxu0
  %v1582 = vadd.f32 %v1505, %v1581
  %v1583 = vpop.f32.mrb[0].mxu0
  %v1584 = vpop.f32.mrb[0].mxu0
  %v1585 = vadd.f32 %v1505, %v1584
  %v1586 = vpop.f32.mrb[0].mxu0
  %1587 = vmatprep.mubr.bf16.mxu0 0
  %1588 = vmatmul.mubr.bf16.gmra.mrb[0].mxu0 %v161
  %v1589 = vpop.f32.mrb[0].mxu0
  %v1590 = vadd.f32 %v1505, %v1589
  %v1591 = vpop.f32.mrb[0].mxu0
  %v1592 = vpop.f32.mrb[0].mxu0
  %v1593 = vadd.f32 %v1505, %v1592
  %v1594 = vpop.f32.mrb[0].mxu0
  %1595 = vmatprep.mubr.bf16.mxu0 0
  %1596 = vmatmul.mubr.bf16.gmra.mrb[0].mxu0 %v164
  %v1597 = vpop.f32.mrb[0].mxu0
  %v1598 = vadd.f32 %v1505, %v1597
  %v1599 = vpop.f32.mrb[0].mxu0
  %v1600 = vpop.f32.mrb[0].mxu0
  %v1601 = vadd.f32 %v1505, %v1600
  %v1602 = vpop.f32.mrb[0].mxu0
  %1603 = vmatprep.mubr.bf16.mxu0 0
  %1604 = vmatmul.mubr.bf16.gmra.mrb[0].mxu0 %v167
  %v1605 = vpop.f32.mrb[0].mxu0
  %v1606 = vadd.f32 %v1505, %v1605
  %v1607 = vpop.f32.mrb[0].mxu0
  %v1608 = vpop.f32.mrb[0].mxu0
  %v1609 = vadd.f32 %v1505, %v1608
  %v1610 = vpop.f32.mrb[0].mxu0
  %1611 = vmatprep.mubr.bf16.mxu0 0
  %1612 = vmatmul.mubr.bf16.gmra.mrb[0].mxu0 %v170
  %v1613 = vpop.f32.mrb[0].mxu0
  %v1614 = vadd.f32 %v1505, %v1613
  %v1615 = vpop.f32.mrb[0].mxu0
  %v1616 = vpop.f32.mrb[0].mxu0
  %v1617 = vadd.f32 %v1505, %v1616
  %v1618 = vpop.f32.mrb[0].mxu0
  %1619 = vmatprep.mubr.bf16.mxu0 0
  %1620 = vmatmul.mubr.bf16.gmra.mrb[0].mxu0 %v173
  %v1621 = vpop.f32.mrb[0].mxu0
  %v1622 = vadd.f32 %v1505, %v1621
  %v1623 = vpop.f32.mrb[0].mxu0
  %v1624 = vpop.f32.mrb[0].mxu0
  %v1625 = vadd.f32 %v1505, %v1624
  %v1626 = vpop.f32.mrb[0].mxu0
  %1627 = vmatprep.mubr.bf16.mxu0 0
  %1628 = vmatmul.mubr.bf16.gmra.mrb[0].mxu0 %v176
  %v1629 = vpop.f32.mrb[0].mxu0
  %v1630 = vadd.f32 %v1505, %v1629
  %v1631 = vpop.f32.mrb[0].mxu0
  %v1632 = vpop.f32.mrb[0].mxu0
  %v1633 = vadd.f32 %v1505, %v1632
  %v1634 = vpop.f32.mrb[0].mxu0
  %1635 = vmatprep.mubr.bf16.mxu0 0
  %1636 = vmatmul.mubr.bf16.gmra.mrb[0].mxu0 %v179
  %v1637 = vpop.f32.mrb[0].mxu0
  %v1638 = vadd.f32 %v1505, %v1637
  %v1639 = vpop.f32.mrb[0].mxu0
  %v1640 = vpop.f32.mrb[0].mxu0
  %v1641 = vadd.f32 %v1505, %v1640
  %v1642 = vpop.f32.mrb[0].mxu0
  %1643 = vmatprep.mubr.bf16.mxu0 0
  %1644 = vmatmul.mubr.bf16.gmra.mrb[0].mxu0 %v182
  %v1645 = vpop.f32.mrb[0].mxu0
  %v1646 = vadd.f32 %v1505, %v1645
  %v1647 = vpop.f32.mrb[0].mxu0
  %v1648 = vpop.f32.mrb[0].mxu0
  %v1649 = vadd.f32 %v1505, %v1648
  %v1650 = vpop.f32.mrb[0].mxu0
  %1651 = vmatprep.mubr.bf16.mxu0 0
  %1652 = vmatmul.mubr.bf16.gmra.mrb[0].mxu0 %v185
  %v1653 = vpop.f32.mrb[0].mxu0
  %v1654 = vadd.f32 %v1505, %v1653
  %v1655 = vpop.f32.mrb[0].mxu0
  %v1656 = vpop.f32.mrb[0].mxu0
  %v1657 = vadd.f32 %v1505, %v1656
  %v1658 = vpop.f32.mrb[0].mxu0
  %1659 = vmatprep.mubr.bf16.mxu0 0
  %1660 = vmatmul.mubr.bf16.gmra.mrb[0].mxu0 %v188
  %v1661 = vpop.f32.mrb[0].mxu0
  %v1662 = vadd.f32 %v1505, %v1661
  %v1663 = vpop.f32.mrb[0].mxu0
  %v1664 = vpop.f32.mrb[0].mxu0
  %v1665 = vadd.f32 %v1505, %v1664
  %v1666 = vpop.f32.mrb[0].mxu0
  %1667 = vmatprep.mubr.bf16.mxu0 0
  %1668 = vmatmul.mubr.bf16.gmra.mrb[0].mxu0 %v191
  %v1669 = vpop.f32.mrb[0].mxu0
  %v1670 = vadd.f32 %v1505, %v1669
  %v1671 = vpop.f32.mrb[0].mxu0
  %v1672 = vpop.f32.mrb[0].mxu0
  %v1673 = vadd.f32 %v1505, %v1672
  %v1674 = vpop.f32.mrb[0].mxu0
  %1675 = vmatprep.mubr.bf16.mxu0 0
  %1676 = vmatmul.mubr.bf16.gmra.mrb[0].mxu0 %v194
  %v1677 = vpop.f32.mrb[0].mxu0
  %v1678 = vadd.f32 %v1505, %v1677
  %v1679 = vpop.f32.mrb[0].mxu0
  %v1680 = vpop.f32.mrb[0].mxu0
  %v1681 = vadd.f32 %v1505, %v1680
  %v1682 = vpop.f32.mrb[0].mxu0
  %1683 = vmatprep.mubr.bf16.mxu0 0
  %1684 = vmatmul.mubr.bf16.gmra.mrb[0].mxu0 %v197
  %v1685 = vpop.f32.mrb[0].mxu0
  %v1686 = vadd.f32 %v1505, %v1685
  %v1687 = vpop.f32.mrb[0].mxu0
  %v1688 = vpop.f32.mrb[0].mxu0
  %v1689 = vadd.f32 %v1505, %v1688
  %v1690 = vpop.f32.mrb[0].mxu0
  %1691 = vmatprep.mubr.bf16.mxu0 0
  %1692 = vmatmul.mubr.bf16.gmra.mrb[0].mxu0 %v200
  %v1693 = vpop.f32.mrb[0].mxu0
  %v1694 = vadd.f32 %v1505, %v1693
  %v1695 = vpop.f32.mrb[0].mxu0
  %v1696 = vpop.f32.mrb[0].mxu0
  %v1697 = vadd.f32 %v1505, %v1696
  %v1698 = vpop.f32.mrb[0].mxu0
  %1699 = vmatprep.mubr.bf16.mxu0 0
  %1700 = vmatmul.mubr.bf16.gmra.mrb[0].mxu0 %v203
  %v1701 = vpop.f32.mrb[0].mxu0
  %v1702 = vadd.f32 %v1505, %v1701
  %v1703 = vpop.f32.mrb[0].mxu0
  %v1704 = vpop.f32.mrb[0].mxu0
  %v1705 = vadd.f32 %v1505, %v1704
  %v1706 = vpop.f32.mrb[0].mxu0
  %1707 = vmatprep.mubr.bf16.mxu0 0
  %1708 = vmatmul.mubr.bf16.gmra.mrb[0].mxu0 %v206
  %v1709 = vpop.f32.mrb[0].mxu0
  %v1710 = vadd.f32 %v1505, %v1709
  %v1711 = vpop.f32.mrb[0].mxu0
  %v1712 = vpop.f32.mrb[0].mxu0
  %v1713 = vadd.f32 %v1505, %v1712
  %v1714 = vpop.f32.mrb[0].mxu0
  %1715 = vmatprep.mubr.bf16.mxu0 0
  %1716 = vmatmul.mubr.bf16.gmra.mrb[0].mxu0 %v209
  %v1717 = vpop.f32.mrb[0].mxu0
  %v1718 = vadd.f32 %v1505, %v1717
  %v1719 = vpop.f32.mrb[0].mxu0
  %v1720 = vpop.f32.mrb[0].mxu0
  %v1721 = vadd.f32 %v1505, %v1720
  %v1722 = vpop.f32.mrb[0].mxu0
  %1723 = vmatprep.mubr.bf16.mxu0 0
  %1724 = vmatmul.mubr.bf16.gmra.mrb[0].mxu0 %v212
  %v1725 = vpop.f32.mrb[0].mxu0
  %v1726 = vadd.f32 %v1505, %v1725
  %v1727 = vpop.f32.mrb[0].mxu0
  %v1728 = vpop.f32.mrb[0].mxu0
  %v1729 = vadd.f32 %v1505, %v1728
  %v1730 = vpop.f32.mrb[0].mxu0
  %1731 = vmatprep.mubr.bf16.mxu0 0
  %1732 = vmatmul.mubr.bf16.gmra.mrb[0].mxu0 %v215
  %v1733 = vpop.f32.mrb[0].mxu0
  %v1734 = vadd.f32 %v1505, %v1733
  %v1735 = vpop.f32.mrb[0].mxu0
  %v1736 = vpop.f32.mrb[0].mxu0
  %v1737 = vadd.f32 %v1505, %v1736
  %v1738 = vpop.f32.mrb[0].mxu0
  %1739 = vmatprep.mubr.bf16.mxu0 0
  %1740 = vmatmul.mubr.bf16.gmra.mrb[0].mxu0 %v218
  %v1741 = vpop.f32.mrb[0].mxu0
  %v1742 = vadd.f32 %v1505, %v1741
  %v1743 = vpop.f32.mrb[0].mxu0
  %v1744 = vpop.f32.mrb[0].mxu0
  %v1745 = vadd.f32 %v1505, %v1744
  %v1746 = vpop.f32.mrb[0].mxu0
  %1747 = vmatprep.mubr.bf16.mxu0 0
  %1748 = vmatmul.mubr.bf16.gmra.mrb[0].mxu0 %v221
  %v1749 = vpop.f32.mrb[0].mxu0
  %v1750 = vadd.f32 %v1505, %v1749
  %v1751 = vpop.f32.mrb[0].mxu0
  %v1752 = vpop.f32.mrb[0].mxu0
  %v1753 = vadd.f32 %v1505, %v1752
  %v1754 = vpop.f32.mrb[0].mxu0
  %1755 = vmatprep.mubr.bf16.mxu0 0
  %1756 = vmatmul.mubr.bf16.gmra.mrb[0].mxu0 %v224
  %v1757 = vpop.f32.mrb[0].mxu0
  %v1758 = vadd.f32 %v1505, %v1757
  %v1759 = vpop.f32.mrb[0].mxu0
  %v1760 = vpop.f32.mrb[0].mxu0
  %v1761 = vadd.f32 %v1505, %v1760
  %v1762 = vpop.f32.mrb[0].mxu0
  %1763 = vmatprep.mubr.bf16.mxu0 0
  %1764 = vmatmul.mubr.bf16.gmra.mrb[0].mxu0 %v227
  %v1765 = vpop.f32.mrb[0].mxu0
  %v1766 = vadd.f32 %v1505, %v1765
  %v1767 = vpop.f32.mrb[0].mxu0
  %v1768 = vpop.f32.mrb[0].mxu0
  %v1769 = vadd.f32 %v1505, %v1768
  %v1770 = vpop.f32.mrb[0].mxu0
  %1771 = vmatprep.mubr.bf16.mxu0 0
  %1772 = vmatmul.mubr.bf16.gmra.mrb[0].mxu0 %v230
  %v1773 = vpop.f32.mrb[0].mxu0
  %v1774 = vadd.f32 %v1505, %v1773
  %v1775 = vpop.f32.mrb[0].mxu0
  %v1776 = vpop.f32.mrb[0].mxu0
  %v1777 = vadd.f32 %v1505, %v1776
  %v1778 = vpop.f32.mrb[0].mxu0
  %1779 = vmatprep.mubr.bf16.mxu0 0
  %1780 = vmatmul.mubr.bf16.gmra.mrb[0].mxu0 %v233
  %v1781 = vpop.f32.mrb[0].mxu0
  %v1782 = vadd.f32 %v1505, %v1781
  %v1783 = vpop.f32.mrb[0].mxu0
  %v1784 = vpop.f32.mrb[0].mxu0
  %v1785 = vadd.f32 %v1505, %v1784
  %v1786 = vpop.f32.mrb[0].mxu0
  %1787 = vmatprep.mubr.bf16.mxu0 0
  %1788 = vmatmul.mubr.bf16.gmra.mrb[0].mxu0 %v236
  %v1789 = vpop.f32.mrb[0].mxu0
  %v1790 = vadd.f32 %v1505, %v1789
  %v1791 = vpop.f32.mrb[0].mxu0
  %v1792 = vpop.f32.mrb[0].mxu0
  %v1793 = vadd.f32 %v1505, %v1792
  %v1794 = vpop.f32.mrb[0].mxu0
  %1795 = vmatprep.mubr.bf16.mxu0 0
  %1796 = vmatmul.mubr.bf16.gmra.mrb[0].mxu0 %v239
  %v1797 = vpop.f32.mrb[0].mxu0
  %v1798 = vadd.f32 %v1505, %v1797
  %v1799 = vpop.f32.mrb[0].mxu0
  %v1800 = vpop.f32.mrb[0].mxu0
  %v1801 = vadd.f32 %v1505, %v1800
  %v1802 = vpop.f32.mrb[0].mxu0
  %1803 = vmatprep.mubr.bf16.mxu0 0
  %1804 = vmatmul.mubr.bf16.gmra.mrb[0].mxu0 %v242
  %v1805 = vpop.f32.mrb[0].mxu0
  %v1806 = vadd.f32 %v1505, %v1805
  %v1807 = vpop.f32.mrb[0].mxu0
  %v1808 = vpop.f32.mrb[0].mxu0
  %v1809 = vadd.f32 %v1505, %v1808
  %v1810 = vpop.f32.mrb[0].mxu0
  %1811 = vdwg.mxu0
  %v1812 = vpack.c.bf16 %v1561, %v1558
  %v1813 = vpack.c.bf16 %v1569, %v1566
  %v1814 = vpack.c.bf16 %v1577, %v1574
  %v1815 = vpack.c.bf16 %v1585, %v1582
  %v1816 = vpack.c.bf16 %v1593, %v1590
  %v1817 = vpack.c.bf16 %v1601, %v1598
  %v1818 = vpack.c.bf16 %v1609, %v1606
  %v1819 = vpack.c.bf16 %v1617, %v1614
  %v1820 = vpack.c.bf16 %v1625, %v1622
  %v1821 = vpack.c.bf16 %v1633, %v1630
  %v1822 = vpack.c.bf16 %v1641, %v1638
  %v1823 = vpack.c.bf16 %v1649, %v1646
  %v1824 = vpack.c.bf16 %v1657, %v1654
  %v1825 = vpack.c.bf16 %v1665, %v1662
  %v1826 = vpack.c.bf16 %v1673, %v1670
  %v1827 = vpack.c.bf16 %v1681, %v1678
  %v1828 = vpack.c.bf16 %v1689, %v1686
  %v1829 = vpack.c.bf16 %v1697, %v1694
  %v1830 = vpack.c.bf16 %v1705, %v1702
  %v1831 = vpack.c.bf16 %v1713, %v1710
  %v1832 = vpack.c.bf16 %v1721, %v1718
  %v1833 = vpack.c.bf16 %v1729, %v1726
  %v1834 = vpack.c.bf16 %v1737, %v1734
  %v1835 = vpack.c.bf16 %v1745, %v1742
  %v1836 = vpack.c.bf16 %v1753, %v1750
  %v1837 = vpack.c.bf16 %v1761, %v1758
  %v1838 = vpack.c.bf16 %v1769, %v1766
  %v1839 = vpack.c.bf16 %v1777, %v1774
  %v1840 = vpack.c.bf16 %v1785, %v1782
  %v1841 = vpack.c.bf16 %v1793, %v1790
  %v1842 = vpack.c.bf16 %v1801, %v1798
  %v1843 = vpack.c.bf16 %v1809, %v1806
  %v1876 = vunpack.c.l.b16 %v1812
  %v1877 = vunpack.c.h.b16 %v1812
  %v1878 = vunpack.c.l.b16 %v1813
  %v1879 = vunpack.c.h.b16 %v1813
  %v1880 = vunpack.c.l.b16 %v1814
  %v1881 = vunpack.c.h.b16 %v1814
  %v1882 = vunpack.c.l.b16 %v1815
  %v1883 = vunpack.c.h.b16 %v1815
  %v1884 = vunpack.c.l.b16 %v1816
  %v1885 = vunpack.c.h.b16 %v1816
  %v1886 = vunpack.c.l.b16 %v1817
  %v1887 = vunpack.c.h.b16 %v1817
  %v1888 = vunpack.c.l.b16 %v1818
  %v1889 = vunpack.c.h.b16 %v1818
  %v1890 = vunpack.c.l.b16 %v1819
  %v1891 = vunpack.c.h.b16 %v1819
  %v1892 = vunpack.c.l.b16 %v1820
  %v1893 = vunpack.c.h.b16 %v1820
  %v1894 = vunpack.c.l.b16 %v1821
  %v1895 = vunpack.c.h.b16 %v1821
  %v1896 = vunpack.c.l.b16 %v1822
  %v1897 = vunpack.c.h.b16 %v1822
  %v1898 = vunpack.c.l.b16 %v1823
  %v1899 = vunpack.c.h.b16 %v1823
  %v1900 = vunpack.c.l.b16 %v1824
  %v1901 = vunpack.c.h.b16 %v1824
  %v1902 = vunpack.c.l.b16 %v1825
  %v1903 = vunpack.c.h.b16 %v1825
  %v1904 = vunpack.c.l.b16 %v1826
  %v1905 = vunpack.c.h.b16 %v1826
  %v1906 = vunpack.c.l.b16 %v1827
  %v1907 = vunpack.c.h.b16 %v1827
  %v1908 = vunpack.c.l.b16 %v1828
  %v1909 = vunpack.c.h.b16 %v1828
  %v1910 = vunpack.c.l.b16 %v1829
  %v1911 = vunpack.c.h.b16 %v1829
  %v1912 = vunpack.c.l.b16 %v1830
  %v1913 = vunpack.c.h.b16 %v1830
  %v1914 = vunpack.c.l.b16 %v1831
  %v1915 = vunpack.c.h.b16 %v1831
  %v1916 = vunpack.c.l.b16 %v1832
  %v1917 = vunpack.c.h.b16 %v1832
  %v1918 = vunpack.c.l.b16 %v1833
  %v1919 = vunpack.c.h.b16 %v1833
  %v1920 = vunpack.c.l.b16 %v1834
  %v1921 = vunpack.c.h.b16 %v1834
  %v1922 = vunpack.c.l.b16 %v1835
  %v1923 = vunpack.c.h.b16 %v1835
  %v1924 = vunpack.c.l.b16 %v1836
  %v1925 = vunpack.c.h.b16 %v1836
  %v1926 = vunpack.c.l.b16 %v1837
  %v1927 = vunpack.c.h.b16 %v1837
  %v1928 = vunpack.c.l.b16 %v1838
  %v1929 = vunpack.c.h.b16 %v1838
  %v1930 = vunpack.c.l.b16 %v1839
  %v1931 = vunpack.c.h.b16 %v1839
  %v1932 = vunpack.c.l.b16 %v1840
  %v1933 = vunpack.c.h.b16 %v1840
  %v1934 = vunpack.c.l.b16 %v1841
  %v1935 = vunpack.c.h.b16 %v1841
  %v1936 = vunpack.c.l.b16 %v1842
  %v1937 = vunpack.c.h.b16 %v1842
  %v1938 = vunpack.c.l.b16 %v1843
  %v1939 = vunpack.c.h.b16 %v1843
  %v1940 = vpack.c.b16 %v1876, %v1876
  %v1941 = vpack.c.b16 %v1877, %v1877
  %v1942 = vpack.c.b16 %v1878, %v1878
  %v1943 = vpack.c.b16 %v1879, %v1879
  %v1944 = vpack.c.b16 %v1880, %v1880
  %v1945 = vpack.c.b16 %v1881, %v1881
  %v1946 = vpack.c.b16 %v1882, %v1882
  %v1947 = vpack.c.b16 %v1883, %v1883
  %v1948 = vpack.c.b16 %v1884, %v1884
  %v1949 = vpack.c.b16 %v1885, %v1885
  %v1950 = vpack.c.b16 %v1886, %v1886
  %v1951 = vpack.c.b16 %v1887, %v1887
  %v1952 = vpack.c.b16 %v1888, %v1888
  %v1953 = vpack.c.b16 %v1889, %v1889
  %v1954 = vpack.c.b16 %v1890, %v1890
  %v1955 = vpack.c.b16 %v1891, %v1891
  %v1956 = vpack.c.b16 %v1892, %v1892
  %v1957 = vpack.c.b16 %v1893, %v1893
  %v1958 = vpack.c.b16 %v1894, %v1894
  %v1959 = vpack.c.b16 %v1895, %v1895
  %v1960 = vpack.c.b16 %v1896, %v1896
  %v1961 = vpack.c.b16 %v1897, %v1897
  %v1962 = vpack.c.b16 %v1898, %v1898
  %v1963 = vpack.c.b16 %v1899, %v1899
  %v1964 = vpack.c.b16 %v1900, %v1900
  %v1965 = vpack.c.b16 %v1901, %v1901
  %v1966 = vpack.c.b16 %v1902, %v1902
  %v1967 = vpack.c.b16 %v1903, %v1903
  %v1968 = vpack.c.b16 %v1904, %v1904
  %v1969 = vpack.c.b16 %v1905, %v1905
  %v1970 = vpack.c.b16 %v1906, %v1906
  %v1971 = vpack.c.b16 %v1907, %v1907
  %v1972 = vpack.c.b16 %v1908, %v1908
  %v1973 = vpack.c.b16 %v1909, %v1909
  %v1974 = vpack.c.b16 %v1910, %v1910
  %v1975 = vpack.c.b16 %v1911, %v1911
  %v1976 = vpack.c.b16 %v1912, %v1912
  %v1977 = vpack.c.b16 %v1913, %v1913
  %v1978 = vpack.c.b16 %v1914, %v1914
  %v1979 = vpack.c.b16 %v1915, %v1915
  %v1980 = vpack.c.b16 %v1916, %v1916
  %v1981 = vpack.c.b16 %v1917, %v1917
  %v1982 = vpack.c.b16 %v1918, %v1918
  %v1983 = vpack.c.b16 %v1919, %v1919
  %v1984 = vpack.c.b16 %v1920, %v1920
  %v1985 = vpack.c.b16 %v1921, %v1921
  %v1986 = vpack.c.b16 %v1922, %v1922
  %v1987 = vpack.c.b16 %v1923, %v1923
  %v1988 = vpack.c.b16 %v1924, %v1924
  %v1989 = vpack.c.b16 %v1925, %v1925
  %v1990 = vpack.c.b16 %v1926, %v1926
  %v1991 = vpack.c.b16 %v1927, %v1927
  %v1992 = vpack.c.b16 %v1928, %v1928
  %v1993 = vpack.c.b16 %v1929, %v1929
  %v1994 = vpack.c.b16 %v1930, %v1930
  %v1995 = vpack.c.b16 %v1931, %v1931
  %v1996 = vpack.c.b16 %v1932, %v1932
  %v1997 = vpack.c.b16 %v1933, %v1933
  %v1998 = vpack.c.b16 %v1934, %v1934
  %v1999 = vpack.c.b16 %v1935, %v1935
  %v2000 = vpack.c.b16 %v1936, %v1936
  %v2001 = vpack.c.b16 %v1937, %v1937
  %v2002 = vpack.c.b16 %v1938, %v1938
  %v2003 = vpack.c.b16 %v1939, %v1939
  %2068 = vst.msk [vmem:[%s9] sm:$0xf] %vm795, %v1940
  %2069 = vst.msk [vmem:[%s9 + $0x4] sm:$0xf] %vm795, %v1941
  %2070 = vst.msk [vmem:[%s9 + $0x8] sm:$0xf] %vm795, %v1942
  %2071 = vst.msk [vmem:[%s9 + $0xc] sm:$0xf] %vm795, %v1943
  %2072 = vst.msk [vmem:[%s9 + $0x10] sm:$0xf] %vm795, %v1944
  %2073 = vst.msk [vmem:[%s9 + $0x14] sm:$0xf] %vm795, %v1945
  %2074 = vst.msk [vmem:[%s9 + $0x18] sm:$0xf] %vm795, %v1946
  %2075 = vst.msk [vmem:[%s9 + $0x1c] sm:$0xf] %vm795, %v1947
  %2076 = vst.msk [vmem:[%s9 + $0x20] sm:$0xf] %vm795, %v1948
  %2077 = vst.msk [vmem:[%s9 + $0x24] sm:$0xf] %vm795, %v1949
  %2078 = vst.msk [vmem:[%s9 + $0x28] sm:$0xf] %vm795, %v1950
  %2079 = vst.msk [vmem:[%s9 + $0x2c] sm:$0xf] %vm795, %v1951
  %2080 = vst.msk [vmem:[%s9 + $0x30] sm:$0xf] %vm795, %v1952
  %2081 = vst.msk [vmem:[%s9 + $0x34] sm:$0xf] %vm795, %v1953
  %2082 = vst.msk [vmem:[%s9 + $0x38] sm:$0xf] %vm795, %v1954
  %2083 = vst.msk [vmem:[%s9 + $0x3c] sm:$0xf] %vm795, %v1955
  %2084 = vst.msk [vmem:[%s9 + $0x40] sm:$0xf] %vm795, %v1956
  %2085 = vst.msk [vmem:[%s9 + $0x44] sm:$0xf] %vm795, %v1957
  %2086 = vst.msk [vmem:[%s9 + $0x48] sm:$0xf] %vm795, %v1958
  %2087 = vst.msk [vmem:[%s9 + $0x4c] sm:$0xf] %vm795, %v1959
  %2088 = vst.msk [vmem:[%s9 + $0x50] sm:$0xf] %vm795, %v1960
  %2089 = vst.msk [vmem:[%s9 + $0x54] sm:$0xf] %vm795, %v1961
  %2090 = vst.msk [vmem:[%s9 + $0x58] sm:$0xf] %vm795, %v1962
  %2091 = vst.msk [vmem:[%s9 + $0x5c] sm:$0xf] %vm795, %v1963
  %2092 = vst.msk [vmem:[%s9 + $0x60] sm:$0xf] %vm795, %v1964
  %2093 = vst.msk [vmem:[%s9 + $0x64] sm:$0xf] %vm795, %v1965
  %2094 = vst.msk [vmem:[%s9 + $0x68] sm:$0xf] %vm795, %v1966
  %2095 = vst.msk [vmem:[%s9 + $0x6c] sm:$0xf] %vm795, %v1967
  %2096 = vst.msk [vmem:[%s9 + $0x70] sm:$0xf] %vm795, %v1968
  %2097 = vst.msk [vmem:[%s9 + $0x74] sm:$0xf] %vm795, %v1969
  %2098 = vst.msk [vmem:[%s9 + $0x78] sm:$0xf] %vm795, %v1970
  %2099 = vst.msk [vmem:[%s9 + $0x7c] sm:$0xf] %vm795, %v1971
  %2100 = vst.msk [vmem:[%s9 + $0x80] sm:$0xf] %vm795, %v1972
  %2101 = vst.msk [vmem:[%s9 + $0x84] sm:$0xf] %vm795, %v1973
  %2102 = vst.msk [vmem:[%s9 + $0x88] sm:$0xf] %vm795, %v1974
  %2103 = vst.msk [vmem:[%s9 + $0x8c] sm:$0xf] %vm795, %v1975
  %2104 = vst.msk [vmem:[%s9 + $0x90] sm:$0xf] %vm795, %v1976
  %2105 = vst.msk [vmem:[%s9 + $0x94] sm:$0xf] %vm795, %v1977
  %2106 = vst.msk [vmem:[%s9 + $0x98] sm:$0xf] %vm795, %v1978
  %2107 = vst.msk [vmem:[%s9 + $0x9c] sm:$0xf] %vm795, %v1979
  %2108 = vst.msk [vmem:[%s9 + $0xa0] sm:$0xf] %vm795, %v1980
  %2109 = vst.msk [vmem:[%s9 + $0xa4] sm:$0xf] %vm795, %v1981
  %2110 = vst.msk [vmem:[%s9 + $0xa8] sm:$0xf] %vm795, %v1982
  %2111 = vst.msk [vmem:[%s9 + $0xac] sm:$0xf] %vm795, %v1983
  %2112 = vst.msk [vmem:[%s9 + $0xb0] sm:$0xf] %vm795, %v1984
  %2113 = vst.msk [vmem:[%s9 + $0xb4] sm:$0xf] %vm795, %v1985
  %2114 = vst.msk [vmem:[%s9 + $0xb8] sm:$0xf] %vm795, %v1986
  %2115 = vst.msk [vmem:[%s9 + $0xbc] sm:$0xf] %vm795, %v1987
  %2116 = vst.msk [vmem:[%s9 + $0xc0] sm:$0xf] %vm795, %v1988
  %2117 = vst.msk [vmem:[%s9 + $0xc4] sm:$0xf] %vm795, %v1989
  %2118 = vst.msk [vmem:[%s9 + $0xc8] sm:$0xf] %vm795, %v1990
  %2119 = vst.msk [vmem:[%s9 + $0xcc] sm:$0xf] %vm795, %v1991
  %2120 = vst.msk [vmem:[%s9 + $0xd0] sm:$0xf] %vm795, %v1992
  %2121 = vst.msk [vmem:[%s9 + $0xd4] sm:$0xf] %vm795, %v1993
  %2122 = vst.msk [vmem:[%s9 + $0xd8] sm:$0xf] %vm795, %v1994
  %2123 = vst.msk [vmem:[%s9 + $0xdc] sm:$0xf] %vm795, %v1995
  %2124 = vst.msk [vmem:[%s9 + $0xe0] sm:$0xf] %vm795, %v1996
  %2125 = vst.msk [vmem:[%s9 + $0xe4] sm:$0xf] %vm795, %v1997
  %2126 = vst.msk [vmem:[%s9 + $0xe8] sm:$0xf] %vm795, %v1998
  %2127 = vst.msk [vmem:[%s9 + $0xec] sm:$0xf] %vm795, %v1999
  %2128 = vst.msk [vmem:[%s9 + $0xf0] sm:$0xf] %vm795, %v2000
  %2129 = vst.msk [vmem:[%s9 + $0xf4] sm:$0xf] %vm795, %v2001
  %2130 = vst.msk [vmem:[%s9 + $0xf8] sm:$0xf] %vm795, %v2002
  %2131 = vst.msk [vmem:[%s9 + $0xfc] sm:$0xf] %vm795, %v2003
  // Predicated region
  $region30: #{tpu_custom_call.1} parent=0 // pred_check
    _
  $region31: #{tpu_custom_call.1} parent=0 // pred_check_branch
    %2133 = sbr.rel (0) target = $region33
  $region32: #{tpu_custom_call.1} parent=0 // pred_region
    _
  $region33: #{tpu_custom_call.1} parent=0 // pred_fallthru
    _
  // Predicated region
  $region34: #{tpu_custom_call.1} parent=0 // pred_check
    _
  $region35: #{tpu_custom_call.1} parent=0 // pred_check_branch
    %2135 = sbr.rel (0) target = $region37
  $region36: #{tpu_custom_call.1} parent=0 // pred_region
    _
  $region37: #{tpu_custom_call.1} parent=0 // pred_fallthru
    _
  // Predicated region
  $region38: #{tpu_custom_call.1} parent=0 // pred_check
    _
  $region39: #{tpu_custom_call.1} parent=0 // pred_check_branch
    %2137 = sbr.rel (0) target = $region41
  $region40: #{tpu_custom_call.1} parent=0 // pred_region
    _
  $region41: #{tpu_custom_call.1} parent=0 // pred_fallthru
    _
  // Predicated region
  $region42: #{tpu_custom_call.1} parent=0 // pred_check
    _
  $region43: #{tpu_custom_call.1} parent=0 // pred_check_branch
    %2139 = sbr.rel (0) target = $region45
  $region44: #{tpu_custom_call.1} parent=0 // pred_region
    _
  $region45: #{tpu_custom_call.1} parent=0 // pred_fallthru
    _
  // Predicated region
  $region46: #{tpu_custom_call.1} parent=0 // pred_check
    _
  $region47: #{tpu_custom_call.1} parent=0 // pred_check_branch
    %2141 = sbr.rel (0) target = $region49
  $region48: #{tpu_custom_call.1} parent=0 // pred_region
    _
  $region49: #{tpu_custom_call.1} parent=0 // pred_fallthru
    _
  // Predicated region
  $region50: #{tpu_custom_call.1} parent=0 // pred_check
    _
  $region51: #{tpu_custom_call.1} parent=0 // pred_check_branch
    %2143 = sbr.rel (0) target = $region53
  $region52: #{tpu_custom_call.1} parent=0 // pred_region
    _
  $region53: #{tpu_custom_call.1} parent=0 // pred_fallthru
    _

</llo_original>
